<compile_context>
chip_gen: v7x
topology: tpu7x:2x2x1
jax: 0.10.0
libtpu: 0.0.40
codegen_flags: <defaults>
</compile_context>

<pallas_src>
import functools
import math

import jax
import jax.numpy as jnp
from jax.experimental import pallas as pl
from jax.experimental.pallas import tpu as pltpu


def _round_up(x, m):
    return int(pl.cdiv(x, m)) * m


def _chip_generation():
    """Best-effort TPU generation (5 = v5e, 6 = v6e, 7 = v7x)."""
    try:
        kind = jax.devices()[0].device_kind.lower()
    except Exception:
        return 6
    for g in (7, 6, 5, 4):
        if f"v{g}" in kind:
            return g
    return 6


def _default_approximate_gelu(gen):
    # v6e/v7x: tanh GELU rides the EUP slot and hides under the MXU; on v5e
    # the erf polynomial is free filler under the slower MXU -> keep exact.
    return gen >= 6


def _ffn_ln_kernel(x_ref, w1_ref, b1_ref, w2_ref, b2_ref, g_ref, beta_ref,
                   o_ref, acc_ref, *, eps, approximate_gelu):
    k = pl.program_id(1)

    @pl.when(k == 0)
    def _():
        acc_ref[...] = jnp.zeros_like(acc_ref)

    # dense_1 chunk: [tm, H] @ [H, tk4] -> [tm, tk4]  (bf16 operands, f32 acc)
    h = jnp.dot(x_ref[...].astype(jnp.bfloat16), w1_ref[...],
                preferred_element_type=jnp.float32)
    h = h + b1_ref[...]

    # GELU on the chunk (elementwise over the 4H dim, so splitting is exact).
    if approximate_gelu:
        c = math.sqrt(2.0 / math.pi)
        h = 0.5 * h * (1.0 + jnp.tanh(c * (h + 0.044715 * h * h * h)))
    else:
        h = 0.5 * h * (1.0 + jax.lax.erf(h * (1.0 / math.sqrt(2.0))))

    # dense_2 chunk: [tm, tk4] @ [tk4, H], accumulated over the 4H axis.
    acc_ref[...] += jnp.dot(h.astype(jnp.bfloat16), w2_ref[...],
                            preferred_element_type=jnp.float32)

    @pl.when(k == pl.num_programs(1) - 1)
    def _():
        # dropout: inference mode -> identity.
        # Residual x is re-read here (short live range, no spill pressure).
        y = acc_ref[...] + b2_ref[...] + x_ref[...].astype(jnp.float32)
        inv_h = 1.0 / y.shape[-1]
        s = jnp.sum(y, axis=-1, keepdims=True)
        ss = jnp.sum(y * y, axis=-1, keepdims=True)
        mean = s * inv_h
        # clamp: single-pass variance can cancel slightly negative in f32.
        var = jnp.maximum(ss * inv_h - mean * mean, 0.0)
        y_n = (y - mean) * jax.lax.rsqrt(var + eps)
        o_ref[...] = (y_n * g_ref[...] + beta_ref[...]).astype(o_ref.dtype)


def intermediate_forward(x, w1, b1, w2, b2, gamma, beta, *,
                         tile_m=None, tile_k4=1024, eps=1e-12,
                         approximate_gelu=None, vmem_limit_bytes=None):
    """x: [B, S, H]. w1: [H, 4H], w2: [4H, H] (pre-transposed), biases [1, *]."""
    B, S, H = x.shape
    H4 = w1.shape[1]
    N = B * S

    gen = _chip_generation()
    if approximate_gelu is None:
        approximate_gelu = _default_approximate_gelu(gen)
    if tile_m is None:
        tile_m = 256 if gen >= 7 else 512          # 64 MiB VMEM on v7x vs 128 MiB
    if vmem_limit_bytes is None:
        vmem_limit_bytes = (42 if gen >= 7 else 96) * 1024 * 1024
    num_cores = 2 if gen >= 7 else 1               # v7x: 2 TensorCores / chip

    # Row tile: largest sensible, sublane-aligned, padded tail, and at least
    # `num_cores` tiles so the "parallel" grid axis feeds both TCs on v7x.
    align = 16 if x.dtype == jnp.bfloat16 else 8
    tm = min(tile_m, _round_up(N, align))
    if num_cores > 1:
        tm = min(tm, _round_up(int(pl.cdiv(N, num_cores)), align))
    tm = max(tm, align)
    n_pad = _round_up(N, tm)

    # 4H streaming chunk (K of the 2nd matmul): lane-aligned multiple of 128,
    # or the full 4H if it doesn't split evenly (then weights are resident).
    if H4 > tile_k4 and H4 % tile_k4 == 0:
        tk4 = tile_k4
    else:
        tk4 = H4
    nk = H4 // tk4
    nm = n_pad // tm

    x2d = x.reshape(N, H)
    if n_pad != N:
        x2d = jnp.pad(x2d, ((0, n_pad - N), (0, 0)))

    # bf16 weights (native MXU rate, half the streamed/resident bytes);
    # f32 biases / LN params.
    w1_bf = w1.astype(jnp.bfloat16)
    w2_bf = w2.astype(jnp.bfloat16)
    b1_f = b1.astype(jnp.float32).reshape(1, H4)
    b2_f = b2.astype(jnp.float32).reshape(1, H)
    g_f = gamma.astype(jnp.float32).reshape(1, H)
    beta_f = beta.astype(jnp.float32).reshape(1, H)

    weight_reads = 1 if nk == 1 else nm
    cost = pl.CostEstimate(
        flops=4 * n_pad * H * H4,                  # two matmuls, 2*M*N*K each
        transcendentals=n_pad * H4,                # one erf/tanh per GELU element
        bytes_accessed=(weight_reads * 2 * H * H4 * 2     # bf16 W1 + W2
                        + 4 * (H4 + 3 * H)                # biases + LN params
                        + 2 * n_pad * H * x2d.dtype.itemsize),   # x in + out
    )

    kernel = functools.partial(_ffn_ln_kernel, eps=eps,
                               approximate_gelu=approximate_gelu)

    def build_and_call(single_buffer_ok):
        def spec(shape, index_map, invariant=False):
            if invariant and single_buffer_ok:
                # Grid-invariant operand: second pipeline buffer is pure waste.
                return pl.BlockSpec(shape, index_map,
                                    pipeline_mode=pl.Buffered(1))
            return pl.BlockSpec(shape, index_map)

        grid_spec = pltpu.PrefetchScalarGridSpec(
            num_scalar_prefetch=0,
            grid=(nm, nk),                         # reduction (4H) axis last
            in_specs=[
                pl.BlockSpec((tm, H), lambda i, k: (i, 0)),                 # x tile
                spec((H, tk4), lambda i, k: (0, k), invariant=(nk == 1)),   # W1 chunk
                spec((1, tk4), lambda i, k: (0, k), invariant=(nk == 1)),   # b1 chunk
                spec((tk4, H), lambda i, k: (k, 0), invariant=(nk == 1)),   # W2 chunk
                spec((1, H), lambda i, k: (0, 0), invariant=True),          # b2
                spec((1, H), lambda i, k: (0, 0), invariant=True),          # gamma
                spec((1, H), lambda i, k: (0, 0), invariant=True),          # beta
            ],
            out_specs=pl.BlockSpec((tm, H), lambda i, k: (i, 0)),
            scratch_shapes=[pltpu.VMEM((tm, H), jnp.float32)],              # f32 acc
        )
        return pl.pallas_call(
            kernel,
            out_shape=jax.ShapeDtypeStruct((n_pad, H), x.dtype),
            grid_spec=grid_spec,
            compiler_params=pltpu.CompilerParams(
                dimension_semantics=("parallel", "arbitrary"),
                vmem_limit_bytes=vmem_limit_bytes,
            ),
            cost_estimate=cost,
        )(x2d, w1_bf, b1_f, w2_bf, b2_f, g_f, beta_f)

    try:
        out2d = build_and_call(True)
    except Exception:
        # pipeline_mode / Buffered(1) unsupported on this jax build:
        # retry with default double buffering (same math).
        out2d = build_and_call(False)

    return out2d[:N].reshape(B, S, H)


if __name__ == "__main__":
    # Small shapes consistent with the module: hidden_size=128, batch=2, seq=8.
    B, S, H = 2, 8, 128
    H4 = 4 * H

    key = jax.random.PRNGKey(0)
    kx, kw1, kb1, kw2, kb2 = jax.random.split(key, 5)

    x = jax.random.normal(kx, (B, S, H), dtype=jnp.float32)

    # Deterministic parameter init (nn.Linear-style scale), stored as [in, out].
    w1 = jax.random.uniform(kw1, (H, H4), jnp.float32, -1.0, 1.0) / math.sqrt(H)
    b1 = jax.random.uniform(kb1, (1, H4), jnp.float32, -1.0, 1.0) / math.sqrt(H)
    w2 = jax.random.uniform(kw2, (H4, H), jnp.float32, -1.0, 1.0) / math.sqrt(H4)
    b2 = jax.random.uniform(kb2, (1, H), jnp.float32, -1.0, 1.0) / math.sqrt(H4)
    gamma = jnp.ones((1, H), jnp.float32)
    beta = jnp.zeros((1, H), jnp.float32)

    out = intermediate_forward(x, w1, b1, w2, b2, gamma, beta)
    jax.block_until_ready(out)

    use_tanh = _default_approximate_gelu(_chip_generation())

    def gelu(h, tanh_approx):
        if tanh_approx:
            c = math.sqrt(2.0 / math.pi)
            return 0.5 * h * (1.0 + jnp.tanh(c * (h + 0.044715 * h * h * h)))
        return 0.5 * h * (1.0 + jax.lax.erf(h / math.sqrt(2.0)))

    # Reference 1: same bf16-operand / f32-accumulate math and same GELU
    # variant as the kernel (tight check).
    def ref_matched(x):
        x2 = x.reshape(-1, H)
        h = jnp.dot(x2.astype(jnp.bfloat16), w1.astype(jnp.bfloat16),
                    preferred_element_type=jnp.float32) + b1
        h = gelu(h, use_tanh)
        y = jnp.dot(h.astype(jnp.bfloat16), w2.astype(jnp.bfloat16),
                    preferred_element_type=jnp.float32) + b2 + x2
        m = y.mean(-1, keepdims=True)
        v = ((y - m) ** 2).mean(-1, keepdims=True)
        return (((y - m) / jnp.sqrt(v + 1e-12)) * gamma + beta).reshape(x.shape)

    # Reference 2: full-f32, exact-erf math (PyTorch semantics; loose check —
    # bf16 MXU operands + GELU variant add ~1e-2 max error).
    def ref_f32(x):
        x2 = x.reshape(-1, H)
        h = x2 @ w1 + b1
        h = gelu(h, False)
        y = h @ w2 + b2 + x2
        m = y.mean(-1, keepdims=True)
        v = ((y - m) ** 2).mean(-1, keepdims=True)
        return (((y - m) / jnp.sqrt(v + 1e-12)) * gamma + beta).reshape(x.shape)

    assert jnp.allclose(out, ref_matched(x), atol=3e-3, rtol=3e-3), \
        "matched-path mismatch"
    assert float(jnp.max(jnp.abs(out - ref_f32(x)))) < 0.1, \
        "f32 sanity check failed"
    print("KERNEL_OK")
</pallas_src>

<mosaic_0001>
module attributes {stable_mosaic.version = 11 : i64} {
  func.func @_ffn_ln_kernel(%arg0: i32, %arg1: i32, %arg2: memref<16x128xf32, #tpu.memory_space<vmem>>, %arg3: memref<128x512xbf16, #tpu.memory_space<vmem>>, %arg4: memref<1x512xf32, #tpu.memory_space<vmem>>, %arg5: memref<512x128xbf16, #tpu.memory_space<vmem>>, %arg6: memref<1x128xf32, #tpu.memory_space<vmem>>, %arg7: memref<1x128xf32, #tpu.memory_space<vmem>>, %arg8: memref<1x128xf32, #tpu.memory_space<vmem>>, %arg9: memref<16x128xf32, #tpu.memory_space<vmem>>, %arg10: memref<16x128xf32, #tpu.memory_space<vmem>>) attributes {dimension_semantics = [#tpu.dimension_semantics<parallel>, #tpu.dimension_semantics<arbitrary>], iteration_bounds = array<i64: 1, 1>, scalar_prefetch = 0 : i64, scratch_operands = 1 : i64, tpu.core_type = #tpu.core_type<tc>, window_params = [{transform_indices = @transform_0, window_bounds = array<i64: 16, 128>}, {pipeline_mode = #tpu.pipeline_mode<synchronous>, transform_indices = @transform_1, window_bounds = array<i64: 128, 512>}, {pipeline_mode = #tpu.pipeline_mode<synchronous>, transform_indices = @transform_2, window_bounds = array<i64: 1, 512>}, {pipeline_mode = #tpu.pipeline_mode<synchronous>, transform_indices = @transform_3, window_bounds = array<i64: 512, 128>}, {pipeline_mode = #tpu.pipeline_mode<synchronous>, transform_indices = @transform_4, window_bounds = array<i64: 1, 128>}, {pipeline_mode = #tpu.pipeline_mode<synchronous>, transform_indices = @transform_5, window_bounds = array<i64: 1, 128>}, {pipeline_mode = #tpu.pipeline_mode<synchronous>, transform_indices = @transform_6, window_bounds = array<i64: 1, 128>}, {transform_indices = @transform_7, window_bounds = array<i64: 16, 128>}]} {
    %c0_i32 = arith.constant 0 : i32
    %0 = arith.cmpi eq, %arg1, %c0_i32 : i32
    %1 = arith.extui %0 : i1 to i32
    %c0_i32_0 = arith.constant 0 : i32
    %2 = arith.cmpi ne, %1, %c0_i32_0 : i32
    scf.if %2 {
      %cst_19 = arith.constant 0.000000e+00 : f32
      %32 = vector.broadcast %cst_19 : f32 to vector<16x128xf32>
      %c0_20 = arith.constant 0 : index
      %c0_21 = arith.constant 0 : index
      %33 = vector.load %arg10[%c0_20, %c0_21] : memref<16x128xf32, #tpu.memory_space<vmem>>, vector<16x128xf32>
      tpu.vector_store %arg10[%c0_20, %c0_21], %32 {strides = array<i32>} : memref<16x128xf32, #tpu.memory_space<vmem>>, vector<16x128xf32>,
    } else {
    }
    %c0 = arith.constant 0 : index
    %c0_1 = arith.constant 0 : index
    %3 = vector.load %arg2[%c0, %c0_1] : memref<16x128xf32, #tpu.memory_space<vmem>>, vector<16x128xf32>
    %4 = arith.truncf %3 : vector<16x128xf32> to vector<16x128xbf16>
    %c0_2 = arith.constant 0 : index
    %c0_3 = arith.constant 0 : index
    %5 = vector.load %arg3[%c0_2, %c0_3] : memref<128x512xbf16, #tpu.memory_space<vmem>>, vector<128x512xbf16>
    %cst = arith.constant dense<0.000000e+00> : vector<16x512xf32>
    %6 = tpu.matmul %4, %5, %cst {dimension_numbers = #tpu.dot_dimension_numbers<[1], [0], [0], [1], [0, 0, 1, 1], [], []>} : vector<16x128xbf16>, vector<128x512xbf16>, vector<16x512xf32> -> vector<16x512xf32>
    %c0_4 = arith.constant 0 : index
    %c0_5 = arith.constant 0 : index
    %7 = vector.load %arg4[%c0_4, %c0_5] : memref<1x512xf32, #tpu.memory_space<vmem>>, vector<1x512xf32>
    %8 = vector.broadcast %7 : vector<1x512xf32> to vector<16x512xf32>
    %9 = arith.addf %6, %8 : vector<16x512xf32>
    %cst_6 = arith.constant 5.000000e-01 : f32
    %10 = vector.broadcast %cst_6 : f32 to vector<16x512xf32>
    %11 = arith.mulf %10, %9 : vector<16x512xf32>
    %cst_7 = arith.constant 4.471500e-02 : f32
    %12 = vector.broadcast %cst_7 : f32 to vector<16x512xf32>
    %13 = arith.mulf %12, %9 : vector<16x512xf32>
    %14 = arith.mulf %13, %9 : vector<16x512xf32>
    %15 = arith.mulf %14, %9 : vector<16x512xf32>
    %16 = arith.addf %9, %15 : vector<16x512xf32>
    %cst_8 = arith.constant 0.797884583 : f32
    %17 = vector.broadcast %cst_8 : f32 to vector<16x512xf32>
    %18 = arith.mulf %17, %16 : vector<16x512xf32>
    %19 = math.tanh %18 : vector<16x512xf32>
    %cst_9 = arith.constant 1.000000e+00 : f32
    %20 = vector.broadcast %cst_9 : f32 to vector<16x512xf32>
    %21 = arith.addf %20, %19 : vector<16x512xf32>
    %22 = arith.mulf %11, %21 : vector<16x512xf32>
    %c0_10 = arith.constant 0 : index
    %c0_11 = arith.constant 0 : index
    %23 = vector.load %arg10[%c0_10, %c0_11] : memref<16x128xf32, #tpu.memory_space<vmem>>, vector<16x128xf32>
    %24 = arith.truncf %22 : vector<16x512xf32> to vector<16x512xbf16>
    %c0_12 = arith.constant 0 : index
    %c0_13 = arith.constant 0 : index
    %25 = vector.load %arg5[%c0_12, %c0_13] : memref<512x128xbf16, #tpu.memory_space<vmem>>, vector<512x128xbf16>
    %cst_14 = arith.constant dense<0.000000e+00> : vector<16x128xf32>
    %26 = tpu.matmul %24, %25, %cst_14 {dimension_numbers = #tpu.dot_dimension_numbers<[1], [0], [0], [1], [0, 0, 1, 1], [], []>} : vector<16x512xbf16>, vector<512x128xbf16>, vector<16x128xf32> -> vector<16x128xf32>
    %27 = arith.addf %23, %26 : vector<16x128xf32>
    %c0_15 = arith.constant 0 : index
    %c0_16 = arith.constant 0 : index
    %28 = vector.load %arg10[%c0_15, %c0_16] : memref<16x128xf32, #tpu.memory_space<vmem>>, vector<16x128xf32>
    tpu.vector_store %arg10[%c0_15, %c0_16], %27 {strides = array<i32>} : memref<16x128xf32, #tpu.memory_space<vmem>>, vector<16x128xf32>,
    %c0_i32_17 = arith.constant 0 : i32
    %29 = arith.cmpi eq, %arg1, %c0_i32_17 : i32
    %30 = arith.extui %29 : i1 to i32
    %c0_i32_18 = arith.constant 0 : i32
    %31 = arith.cmpi ne, %30, %c0_i32_18 : i32
    scf.if %31 {
      %c0_19 = arith.constant 0 : index
      %c0_20 = arith.constant 0 : index
      %32 = vector.load %arg10[%c0_19, %c0_20] : memref<16x128xf32, #tpu.memory_space<vmem>>, vector<16x128xf32>
      %c0_21 = arith.constant 0 : index
      %c0_22 = arith.constant 0 : index
      %33 = vector.load %arg6[%c0_21, %c0_22] : memref<1x128xf32, #tpu.memory_space<vmem>>, vector<1x128xf32>
      %34 = vector.broadcast %33 : vector<1x128xf32> to vector<16x128xf32>
      %35 = arith.addf %32, %34 : vector<16x128xf32>
      %c0_23 = arith.constant 0 : index
      %c0_24 = arith.constant 0 : index
      %36 = vector.load %arg2[%c0_23, %c0_24] : memref<16x128xf32, #tpu.memory_space<vmem>>, vector<16x128xf32>
      %37 = arith.addf %35, %36 : vector<16x128xf32>
      %cst_25 = arith.constant dense<0.000000e+00> : vector<16xf32>
      %38 = vector.multi_reduction <add>, %37, %cst_25 [1] : vector<16x128xf32> to vector<16xf32>
      %39 = vector.shape_cast %38 : vector<16xf32> to vector<16x1xf32>
      %40 = arith.mulf %37, %37 : vector<16x128xf32>
      %cst_26 = arith.constant dense<0.000000e+00> : vector<16xf32>
      %41 = vector.multi_reduction <add>, %40, %cst_26 [1] : vector<16x128xf32> to vector<16xf32>
      %42 = vector.shape_cast %41 : vector<16xf32> to vector<16x1xf32>
      %cst_27 = arith.constant 7.812500e-03 : f32
      %43 = vector.broadcast %cst_27 : f32 to vector<16x1xf32>
      %44 = arith.mulf %39, %43 : vector<16x1xf32>
      %cst_28 = arith.constant 7.812500e-03 : f32
      %45 = vector.broadcast %cst_28 : f32 to vector<16x1xf32>
      %46 = arith.mulf %42, %45 : vector<16x1xf32>
      %47 = arith.mulf %44, %44 : vector<16x1xf32>
      %48 = arith.subf %46, %47 : vector<16x1xf32>
      %cst_29 = arith.constant 0.000000e+00 : f32
      %49 = vector.broadcast %cst_29 : f32 to vector<16x1xf32>
      %50 = arith.maximumf %48, %49 : vector<16x1xf32>
      %51 = vector.broadcast %44 : vector<16x1xf32> to vector<16x128xf32>
      %52 = arith.subf %37, %51 : vector<16x128xf32>
      %cst_30 = arith.constant 9.99999996E-13 : f32
      %53 = vector.broadcast %cst_30 : f32 to vector<16x1xf32>
      %54 = arith.addf %50, %53 : vector<16x1xf32>
      %55 = math.rsqrt %54 : vector<16x1xf32>
      %56 = vector.broadcast %55 : vector<16x1xf32> to vector<16x128xf32>
      %57 = arith.mulf %52, %56 : vector<16x128xf32>
      %c0_31 = arith.constant 0 : index
      %c0_32 = arith.constant 0 : index
      %58 = vector.load %arg7[%c0_31, %c0_32] : memref<1x128xf32, #tpu.memory_space<vmem>>, vector<1x128xf32>
      %59 = vector.broadcast %58 : vector<1x128xf32> to vector<16x128xf32>
      %60 = arith.mulf %57, %59 : vector<16x128xf32>
      %c0_33 = arith.constant 0 : index
      %c0_34 = arith.constant 0 : index
      %61 = vector.load %arg8[%c0_33, %c0_34] : memref<1x128xf32, #tpu.memory_space<vmem>>, vector<1x128xf32>
      %62 = vector.broadcast %61 : vector<1x128xf32> to vector<16x128xf32>
      %63 = arith.addf %60, %62 : vector<16x128xf32>
      %c0_35 = arith.constant 0 : index
      %c0_36 = arith.constant 0 : index
      %64 = vector.load %arg9[%c0_35, %c0_36] : memref<16x128xf32, #tpu.memory_space<vmem>>, vector<16x128xf32>
      tpu.vector_store %arg9[%c0_35, %c0_36], %63 {strides = array<i32>} : memref<16x128xf32, #tpu.memory_space<vmem>>, vector<16x128xf32>,
    } else {
    }
    return
  }
  func.func @transform_0(%arg0: i32, %arg1: i32) -> (i32, i32) {
    %c0_i32 = arith.constant 0 : i32
    %c0_i32_0 = arith.constant 0 : i32
    return %arg0, %c0_i32 : i32, i32
  }
  func.func @transform_1(%arg0: i32, %arg1: i32) -> (i32, i32) {
    %c0_i32 = arith.constant 0 : i32
    %c0_i32_0 = arith.constant 0 : i32
    return %c0_i32, %arg1 : i32, i32
  }
  func.func @transform_2(%arg0: i32, %arg1: i32) -> (i32, i32) {
    %c0_i32 = arith.constant 0 : i32
    %c0_i32_0 = arith.constant 0 : i32
    return %c0_i32, %arg1 : i32, i32
  }
  func.func @transform_3(%arg0: i32, %arg1: i32) -> (i32, i32) {
    %c0_i32 = arith.constant 0 : i32
    %c0_i32_0 = arith.constant 0 : i32
    return %arg1, %c0_i32 : i32, i32
  }
  func.func @transform_4(%arg0: i32, %arg1: i32) -> (i32, i32) {
    %c0_i32 = arith.constant 0 : i32
    %c0_i32_0 = arith.constant 0 : i32
    %c0_i32_1 = arith.constant 0 : i32
    return %c0_i32, %c0_i32_0 : i32, i32
  }
  func.func @transform_5(%arg0: i32, %arg1: i32) -> (i32, i32) {
    %c0_i32 = arith.constant 0 : i32
    %c0_i32_0 = arith.constant 0 : i32
    %c0_i32_1 = arith.constant 0 : i32
    return %c0_i32, %c0_i32_0 : i32, i32
  }
  func.func @transform_6(%arg0: i32, %arg1: i32) -> (i32, i32) {
    %c0_i32 = arith.constant 0 : i32
    %c0_i32_0 = arith.constant 0 : i32
    %c0_i32_1 = arith.constant 0 : i32
    return %c0_i32, %c0_i32_0 : i32, i32
  }
  func.func @transform_7(%arg0: i32, %arg1: i32) -> (i32, i32) {
    %c0_i32 = arith.constant 0 : i32
    %c0_i32_0 = arith.constant 0 : i32
    return %arg0, %c0_i32 : i32, i32
  }
}

module attributes {stable_mosaic.version = 11 : i64} {
  func.func @_ffn_ln_kernel(%arg0: i32, %arg1: i32, %arg2: memref<16x128xf32, #tpu.memory_space<vmem>>, %arg3: memref<128x512xbf16, #tpu.memory_space<vmem>>, %arg4: memref<1x512xf32, #tpu.memory_space<vmem>>, %arg5: memref<512x128xbf16, #tpu.memory_space<vmem>>, %arg6: memref<1x128xf32, #tpu.memory_space<vmem>>, %arg7: memref<1x128xf32, #tpu.memory_space<vmem>>, %arg8: memref<1x128xf32, #tpu.memory_space<vmem>>, %arg9: memref<16x128xf32, #tpu.memory_space<vmem>>, %arg10: memref<16x128xf32, #tpu.memory_space<vmem>>) attributes {dimension_semantics = [#tpu.dimension_semantics<parallel>, #tpu.dimension_semantics<arbitrary>], iteration_bounds = array<i64: 1, 1>, scalar_prefetch = 0 : i64, scratch_operands = 1 : i64, tpu.core_type = #tpu.core_type<tc>, window_params = [{transform_indices = @transform_0, window_bounds = array<i64: 16, 128>}, {transform_indices = @transform_1, window_bounds = array<i64: 128, 512>}, {transform_indices = @transform_2, window_bounds = array<i64: 1, 512>}, {transform_indices = @transform_3, window_bounds = array<i64: 512, 128>}, {pipeline_mode = #tpu.pipeline_mode<synchronous>, transform_indices = @transform_4, window_bounds = array<i64: 1, 128>}, {pipeline_mode = #tpu.pipeline_mode<synchronous>, transform_indices = @transform_5, window_bounds = array<i64: 1, 128>}, {pipeline_mode = #tpu.pipeline_mode<synchronous>, transform_indices = @transform_6, window_bounds = array<i64: 1, 128>}, {transform_indices = @transform_7, window_bounds = array<i64: 16, 128>}]} {
    %c0_i32 = arith.constant 0 : i32
    %0 = arith.cmpi eq, %arg1, %c0_i32 : i32
    %1 = arith.extui %0 : i1 to i32
    %c0_i32_0 = arith.constant 0 : i32
    %2 = arith.cmpi ne, %1, %c0_i32_0 : i32
    scf.if %2 {
      %cst_19 = arith.constant 0.000000e+00 : f32
      %32 = vector.broadcast %cst_19 : f32 to vector<16x128xf32>
      %c0_20 = arith.constant 0 : index
      %c0_21 = arith.constant 0 : index
      %33 = vector.load %arg10[%c0_20, %c0_21] : memref<16x128xf32, #tpu.memory_space<vmem>>, vector<16x128xf32>
      tpu.vector_store %arg10[%c0_20, %c0_21], %32 {strides = array<i32>} : memref<16x128xf32, #tpu.memory_space<vmem>>, vector<16x128xf32>,
    } else {
    }
    %c0 = arith.constant 0 : index
    %c0_1 = arith.constant 0 : index
    %3 = vector.load %arg2[%c0, %c0_1] : memref<16x128xf32, #tpu.memory_space<vmem>>, vector<16x128xf32>
    %4 = arith.truncf %3 : vector<16x128xf32> to vector<16x128xbf16>
    %c0_2 = arith.constant 0 : index
    %c0_3 = arith.constant 0 : index
    %5 = vector.load %arg3[%c0_2, %c0_3] : memref<128x512xbf16, #tpu.memory_space<vmem>>, vector<128x512xbf16>
    %cst = arith.constant dense<0.000000e+00> : vector<16x512xf32>
    %6 = tpu.matmul %4, %5, %cst {dimension_numbers = #tpu.dot_dimension_numbers<[1], [0], [0], [1], [0, 0, 1, 1], [], []>} : vector<16x128xbf16>, vector<128x512xbf16>, vector<16x512xf32> -> vector<16x512xf32>
    %c0_4 = arith.constant 0 : index
    %c0_5 = arith.constant 0 : index
    %7 = vector.load %arg4[%c0_4, %c0_5] : memref<1x512xf32, #tpu.memory_space<vmem>>, vector<1x512xf32>
    %8 = vector.broadcast %7 : vector<1x512xf32> to vector<16x512xf32>
    %9 = arith.addf %6, %8 : vector<16x512xf32>
    %cst_6 = arith.constant 5.000000e-01 : f32
    %10 = vector.broadcast %cst_6 : f32 to vector<16x512xf32>
    %11 = arith.mulf %10, %9 : vector<16x512xf32>
    %cst_7 = arith.constant 4.471500e-02 : f32
    %12 = vector.broadcast %cst_7 : f32 to vector<16x512xf32>
    %13 = arith.mulf %12, %9 : vector<16x512xf32>
    %14 = arith.mulf %13, %9 : vector<16x512xf32>
    %15 = arith.mulf %14, %9 : vector<16x512xf32>
    %16 = arith.addf %9, %15 : vector<16x512xf32>
    %cst_8 = arith.constant 0.797884583 : f32
    %17 = vector.broadcast %cst_8 : f32 to vector<16x512xf32>
    %18 = arith.mulf %17, %16 : vector<16x512xf32>
    %19 = math.tanh %18 : vector<16x512xf32>
    %cst_9 = arith.constant 1.000000e+00 : f32
    %20 = vector.broadcast %cst_9 : f32 to vector<16x512xf32>
    %21 = arith.addf %20, %19 : vector<16x512xf32>
    %22 = arith.mulf %11, %21 : vector<16x512xf32>
    %c0_10 = arith.constant 0 : index
    %c0_11 = arith.constant 0 : index
    %23 = vector.load %arg10[%c0_10, %c0_11] : memref<16x128xf32, #tpu.memory_space<vmem>>, vector<16x128xf32>
    %24 = arith.truncf %22 : vector<16x512xf32> to vector<16x512xbf16>
    %c0_12 = arith.constant 0 : index
    %c0_13 = arith.constant 0 : index
    %25 = vector.load %arg5[%c0_12, %c0_13] : memref<512x128xbf16, #tpu.memory_space<vmem>>, vector<512x128xbf16>
    %cst_14 = arith.constant dense<0.000000e+00> : vector<16x128xf32>
    %26 = tpu.matmul %24, %25, %cst_14 {dimension_numbers = #tpu.dot_dimension_numbers<[1], [0], [0], [1], [0, 0, 1, 1], [], []>} : vector<16x512xbf16>, vector<512x128xbf16>, vector<16x128xf32> -> vector<16x128xf32>
    %27 = arith.addf %23, %26 : vector<16x128xf32>
    %c0_15 = arith.constant 0 : index
    %c0_16 = arith.constant 0 : index
    %28 = vector.load %arg10[%c0_15, %c0_16] : memref<16x128xf32, #tpu.memory_space<vmem>>, vector<16x128xf32>
    tpu.vector_store %arg10[%c0_15, %c0_16], %27 {strides = array<i32>} : memref<16x128xf32, #tpu.memory_space<vmem>>, vector<16x128xf32>,
    %c0_i32_17 = arith.constant 0 : i32
    %29 = arith.cmpi eq, %arg1, %c0_i32_17 : i32
    %30 = arith.extui %29 : i1 to i32
    %c0_i32_18 = arith.constant 0 : i32
    %31 = arith.cmpi ne, %30, %c0_i32_18 : i32
    scf.if %31 {
      %c0_19 = arith.constant 0 : index
      %c0_20 = arith.constant 0 : index
      %32 = vector.load %arg10[%c0_19, %c0_20] : memref<16x128xf32, #tpu.memory_space<vmem>>, vector<16x128xf32>
      %c0_21 = arith.constant 0 : index
      %c0_22 = arith.constant 0 : index
      %33 = vector.load %arg6[%c0_21, %c0_22] : memref<1x128xf32, #tpu.memory_space<vmem>>, vector<1x128xf32>
      %34 = vector.broadcast %33 : vector<1x128xf32> to vector<16x128xf32>
      %35 = arith.addf %32, %34 : vector<16x128xf32>
      %c0_23 = arith.constant 0 : index
      %c0_24 = arith.constant 0 : index
      %36 = vector.load %arg2[%c0_23, %c0_24] : memref<16x128xf32, #tpu.memory_space<vmem>>, vector<16x128xf32>
      %37 = arith.addf %35, %36 : vector<16x128xf32>
      %cst_25 = arith.constant dense<0.000000e+00> : vector<16xf32>
      %38 = vector.multi_reduction <add>, %37, %cst_25 [1] : vector<16x128xf32> to vector<16xf32>
      %39 = vector.shape_cast %38 : vector<16xf32> to vector<16x1xf32>
      %40 = arith.mulf %37, %37 : vector<16x128xf32>
      %cst_26 = arith.constant dense<0.000000e+00> : vector<16xf32>
      %41 = vector.multi_reduction <add>, %40, %cst_26 [1] : vector<16x128xf32> to vector<16xf32>
      %42 = vector.shape_cast %41 : vector<16xf32> to vector<16x1xf32>
      %cst_27 = arith.constant 7.812500e-03 : f32
      %43 = vector.broadcast %cst_27 : f32 to vector<16x1xf32>
      %44 = arith.mulf %39, %43 : vector<16x1xf32>
      %cst_28 = arith.constant 7.812500e-03 : f32
      %45 = vector.broadcast %cst_28 : f32 to vector<16x1xf32>
      %46 = arith.mulf %42, %45 : vector<16x1xf32>
      %47 = arith.mulf %44, %44 : vector<16x1xf32>
      %48 = arith.subf %46, %47 : vector<16x1xf32>
      %cst_29 = arith.constant 0.000000e+00 : f32
      %49 = vector.broadcast %cst_29 : f32 to vector<16x1xf32>
      %50 = arith.maximumf %48, %49 : vector<16x1xf32>
      %51 = vector.broadcast %44 : vector<16x1xf32> to vector<16x128xf32>
      %52 = arith.subf %37, %51 : vector<16x128xf32>
      %cst_30 = arith.constant 9.99999996E-13 : f32
      %53 = vector.broadcast %cst_30 : f32 to vector<16x1xf32>
      %54 = arith.addf %50, %53 : vector<16x1xf32>
      %55 = math.rsqrt %54 : vector<16x1xf32>
      %56 = vector.broadcast %55 : vector<16x1xf32> to vector<16x128xf32>
      %57 = arith.mulf %52, %56 : vector<16x128xf32>
      %c0_31 = arith.constant 0 : index
      %c0_32 = arith.constant 0 : index
      %58 = vector.load %arg7[%c0_31, %c0_32] : memref<1x128xf32, #tpu.memory_space<vmem>>, vector<1x128xf32>
      %59 = vector.broadcast %58 : vector<1x128xf32> to vector<16x128xf32>
      %60 = arith.mulf %57, %59 : vector<16x128xf32>
      %c0_33 = arith.constant 0 : index
      %c0_34 = arith.constant 0 : index
      %61 = vector.load %arg8[%c0_33, %c0_34] : memref<1x128xf32, #tpu.memory_space<vmem>>, vector<1x128xf32>
      %62 = vector.broadcast %61 : vector<1x128xf32> to vector<16x128xf32>
      %63 = arith.addf %60, %62 : vector<16x128xf32>
      %c0_35 = arith.constant 0 : index
      %c0_36 = arith.constant 0 : index
      %64 = vector.load %arg9[%c0_35, %c0_36] : memref<16x128xf32, #tpu.memory_space<vmem>>, vector<16x128xf32>
      tpu.vector_store %arg9[%c0_35, %c0_36], %63 {strides = array<i32>} : memref<16x128xf32, #tpu.memory_space<vmem>>, vector<16x128xf32>,
    } else {
    }
    return
  }
  func.func @transform_0(%arg0: i32, %arg1: i32) -> (i32, i32) {
    %c0_i32 = arith.constant 0 : i32
    %c0_i32_0 = arith.constant 0 : i32
    return %arg0, %c0_i32 : i32, i32
  }
  func.func @transform_1(%arg0: i32, %arg1: i32) -> (i32, i32) {
    %c0_i32 = arith.constant 0 : i32
    %c0_i32_0 = arith.constant 0 : i32
    return %c0_i32, %arg1 : i32, i32
  }
  func.func @transform_2(%arg0: i32, %arg1: i32) -> (i32, i32) {
    %c0_i32 = arith.constant 0 : i32
    %c0_i32_0 = arith.constant 0 : i32
    return %c0_i32, %arg1 : i32, i32
  }
  func.func @transform_3(%arg0: i32, %arg1: i32) -> (i32, i32) {
    %c0_i32 = arith.constant 0 : i32
    %c0_i32_0 = arith.constant 0 : i32
    return %arg1, %c0_i32 : i32, i32
  }
  func.func @transform_4(%arg0: i32, %arg1: i32) -> (i32, i32) {
    %c0_i32 = arith.constant 0 : i32
    %c0_i32_0 = arith.constant 0 : i32
    %c0_i32_1 = arith.constant 0 : i32
    return %c0_i32, %c0_i32_0 : i32, i32
  }
  func.func @transform_5(%arg0: i32, %arg1: i32) -> (i32, i32) {
    %c0_i32 = arith.constant 0 : i32
    %c0_i32_0 = arith.constant 0 : i32
    %c0_i32_1 = arith.constant 0 : i32
    return %c0_i32, %c0_i32_0 : i32, i32
  }
  func.func @transform_6(%arg0: i32, %arg1: i32) -> (i32, i32) {
    %c0_i32 = arith.constant 0 : i32
    %c0_i32_0 = arith.constant 0 : i32
    %c0_i32_1 = arith.constant 0 : i32
    return %c0_i32, %c0_i32_0 : i32, i32
  }
  func.func @transform_7(%arg0: i32, %arg1: i32) -> (i32, i32) {
    %c0_i32 = arith.constant 0 : i32
    %c0_i32_0 = arith.constant 0 : i32
    return %arg0, %c0_i32 : i32, i32
  }
}

</mosaic_0001>

<llo_original>
// kernel: tpu_custom_call.1
$region0: #{tpu_custom_call.1}
  #allocation0 [shape = 'u32[]', space=smem, size = 0x4, offset = 0x4, fixed_abs, tag = 'smem constant byte address 0x4 - core index']
  #allocation1 [shape = 'u32[144,128]{1,0:T(1,128)}', space=vmem, size = 0x12000, scoped, tag = 'internal scratch']
  #allocation2 [shape = 'f32[16,128]{1,0:T(8,128)}', space=vmem, size = 0x2000, scoped, tag = 'scratch operand']
  %s0 = inlined_call_operand.hbm [shape: f32[16,128], index: 0, kind: input, shape index: {}]
  %s1 = inlined_call_operand.hbm [shape: bf16[128,512], index: 1, kind: input, shape index: {}]
  %s2 = inlined_call_operand.hbm [shape: f32[1,512], index: 2, kind: input, shape index: {}]
  %s3 = inlined_call_operand.hbm [shape: bf16[512,128], index: 3, kind: input, shape index: {}]
  %s4 = inlined_call_operand.hbm [shape: f32[1,128], index: 4, kind: input, shape index: {}]
  %s5 = inlined_call_operand.hbm [shape: f32[1,128], index: 5, kind: input, shape index: {}]
  %s6 = inlined_call_operand.hbm [shape: f32[1,128], index: 6, kind: input, shape index: {}]
  %s7 = inlined_call_operand.hbm [shape: f32[16,128], index: 7, kind: output, shape index: {}]
  %s8 = sld [smem:[#allocation0]]
  $region74: #{tpu_custom_call.1} parent=0
    _
  %s10 = ssub.s32 1, %s8
  %s11 = scalar_select 0, %s10, %s8
  $region1: #{tpu_custom_call.1} parent=0
    #allocation3 [shape = 'u8[8192]{0}', space=vmem, size = 0x2000, scoped, tag = 'input window, operand 0, single buffered']
    #allocation4 [shape = 's32[1]{0}', space=sflag, size = 0x4, scoped, tag = 'scoped memory for tpu_custom_call.1']
    #allocation5 [shape = 's32[1]{0}', space=sflag, size = 0x4, scoped, tag = 'scoped memory for tpu_custom_call.1']
    #allocation6 [shape = 'u8[131072]{0}', space=vmem, size = 0x20000, scoped, tag = 'input window, operand 1, single buffered']
    #allocation7 [shape = 's32[1]{0}', space=sflag, size = 0x4, scoped, tag = 'scoped memory for tpu_custom_call.1']
    #allocation8 [shape = 'u8[2048]{0}', space=vmem, size = 0x800, scoped, tag = 'input window, operand 2, single buffered']
    #allocation9 [shape = 'u8[131072]{0}', space=vmem, size = 0x20000, scoped, tag = 'input window, operand 3, single buffered']
    #allocation10 [shape = 's32[1]{0}', space=sflag, size = 0x4, scoped, tag = 'scoped memory for tpu_custom_call.1']
    #allocation11 [shape = 'u8[512]{0}', space=vmem, size = 0x400, scoped, tag = 'input window, operand 4, single buffered']
    #allocation12 [shape = 'u8[512]{0}', space=vmem, size = 0x400, scoped, tag = 'input window, operand 5, single buffered']
    #allocation13 [shape = 's32[1]{0}', space=sflag, size = 0x4, scoped, tag = 'scoped memory for tpu_custom_call.1']
    #allocation14 [shape = 'u8[512]{0}', space=vmem, size = 0x400, scoped, tag = 'input window, operand 6, single buffered']
    #allocation15 [shape = 'u8[8192]{0}', space=vmem, size = 0x2000, scoped, tag = 'output window, operand 0, single buffered']
    %12 = vsyncpa [#allocation4], 0
    %13 = vsyncpa [#allocation7], 0
    %14 = vsyncpa [#allocation10], 0
    %15 = vsyncpa [#allocation13], 0
    %16 = vsyncpa [#allocation5], 0
    // Predicated region
    $region2: #{tpu_custom_call.1} parent=1 // pred_check
      _
    $region3: #{tpu_custom_call.1} parent=1 // pred_check_branch
      %18 = sbr.rel (0) target = $region5
    $region4: #{tpu_custom_call.1} parent=1 // pred_region
      %s20 = ssub.s32 256, 256
      %21 = vsyncadd [#allocation4], %s20
      %s22 = sshll.u32 [#allocation3], 4
      %s23 = int_to_ptr.vmem [resolvable:$true] %s22
      %28 = dma.hbm_to_vmem [thread:$0]  %s0, 256, %s23, [#allocation4], 128, 128, 8
    $region5: #{tpu_custom_call.1} parent=1 // pred_fallthru
      _
    // Predicated region
    $region6: #{tpu_custom_call.1} parent=1 // pred_check
      _
    $region7: #{tpu_custom_call.1} parent=1 // pred_check_branch
      %30 = sbr.rel (0) target = $region9
    $region8: #{tpu_custom_call.1} parent=1 // pred_region
      %s32 = ssub.s32 4096, 4096
      %33 = vsyncadd [#allocation7], %s32
      %s34 = sshll.u32 [#allocation6], 4
      %s35 = int_to_ptr.vmem [resolvable:$true] %s34
      %40 = dma.hbm_to_vmem [thread:$0]  %s1, 4096, %s35, [#allocation7], 256, 256, 16
    $region9: #{tpu_custom_call.1} parent=1 // pred_fallthru
      _
    // Predicated region
    $region10: #{tpu_custom_call.1} parent=1 // pred_check
      _
    $region11: #{tpu_custom_call.1} parent=1 // pred_check_branch
      %42 = sbr.rel (0) target = $region13
    $region12: #{tpu_custom_call.1} parent=1 // pred_region
      %s44 = ssub.s32 64, 64
      %45 = vsyncadd [#allocation7], %s44
      %s47 = sshll.u32 [#allocation8], 4
      %s48 = int_to_ptr.vmem [resolvable:$true] %s47
      %50 = dma.hbm_to_vmem [thread:$0]  %s2, 64, %s48, [#allocation7]
    $region13: #{tpu_custom_call.1} parent=1 // pred_fallthru
      _
    // Predicated region
    $region14: #{tpu_custom_call.1} parent=1 // pred_check
      _
    $region15: #{tpu_custom_call.1} parent=1 // pred_check_branch
      %52 = sbr.rel (0) target = $region17
    $region16: #{tpu_custom_call.1} parent=1 // pred_region
      %s54 = ssub.s32 4096, 4096
      %55 = vsyncadd [#allocation10], %s54
      %s56 = sshll.u32 [#allocation9], 4
      %s57 = int_to_ptr.vmem [resolvable:$true] %s56
      %62 = dma.hbm_to_vmem [thread:$0]  %s3, 4096, %s57, [#allocation10], 64, 64, 4
    $region17: #{tpu_custom_call.1} parent=1 // pred_fallthru
      _
    // Predicated region
    $region18: #{tpu_custom_call.1} parent=1 // pred_check
      _
    $region19: #{tpu_custom_call.1} parent=1 // pred_check_branch
      %64 = sbr.rel (0) target = $region21
    $region20: #{tpu_custom_call.1} parent=1 // pred_region
      %s66 = ssub.s32 16, 16
      %67 = vsyncadd [#allocation10], %s66
      %s69 = sshll.u32 [#allocation11], 4
      %s70 = int_to_ptr.vmem [resolvable:$true] %s69
      %72 = dma.hbm_to_vmem [thread:$0]  %s4, 16, %s70, [#allocation10]
    $region21: #{tpu_custom_call.1} parent=1 // pred_fallthru
      _
    // Predicated region
    $region22: #{tpu_custom_call.1} parent=1 // pred_check
      _
    $region23: #{tpu_custom_call.1} parent=1 // pred_check_branch
      %74 = sbr.rel (0) target = $region25
    $region24: #{tpu_custom_call.1} parent=1 // pred_region
      %s76 = ssub.s32 16, 16
      %77 = vsyncadd [#allocation13], %s76
      %s79 = sshll.u32 [#allocation12], 4
      %s80 = int_to_ptr.vmem [resolvable:$true] %s79
      %82 = dma.hbm_to_vmem [thread:$0]  %s5, 16, %s80, [#allocation13]
    $region25: #{tpu_custom_call.1} parent=1 // pred_fallthru
      _
    // Predicated region
    $region26: #{tpu_custom_call.1} parent=1 // pred_check
      _
    $region27: #{tpu_custom_call.1} parent=1 // pred_check_branch
      %84 = sbr.rel (0) target = $region29
    $region28: #{tpu_custom_call.1} parent=1 // pred_region
      %s86 = ssub.s32 16, 16
      %87 = vsyncadd [#allocation13], %s86
      %s89 = sshll.u32 [#allocation14], 4
      %s90 = int_to_ptr.vmem [resolvable:$true] %s89
      %92 = dma.hbm_to_vmem [thread:$0]  %s6, 16, %s90, [#allocation13]
    $region29: #{tpu_custom_call.1} parent=1 // pred_fallthru
      _
    // Predicated region
    $region30: #{tpu_custom_call.1} parent=1 // pred_check
      _
    $region31: #{tpu_custom_call.1} parent=1 // pred_check_branch
      %94 = sbr.rel (0) target = $region33
    $region32: #{tpu_custom_call.1} parent=1 // pred_region
      %95 = dma.done [#allocation4], 256
    $region33: #{tpu_custom_call.1} parent=1 // pred_fallthru
      _
    // Predicated region
    $region34: #{tpu_custom_call.1} parent=1 // pred_check
      _
    $region35: #{tpu_custom_call.1} parent=1 // pred_check_branch
      %97 = sbr.rel (0) target = $region37
    $region36: #{tpu_custom_call.1} parent=1 // pred_region
      %98 = dma.done [#allocation7], 4096
    $region37: #{tpu_custom_call.1} parent=1 // pred_fallthru
      _
    // Predicated region
    $region38: #{tpu_custom_call.1} parent=1 // pred_check
      _
    $region39: #{tpu_custom_call.1} parent=1 // pred_check_branch
      %100 = sbr.rel (0) target = $region41
    $region40: #{tpu_custom_call.1} parent=1 // pred_region
      %101 = dma.done [#allocation7], 64
    $region41: #{tpu_custom_call.1} parent=1 // pred_fallthru
      _
    // Predicated region
    $region42: #{tpu_custom_call.1} parent=1 // pred_check
      _
    $region43: #{tpu_custom_call.1} parent=1 // pred_check_branch
      %103 = sbr.rel (0) target = $region45
    $region44: #{tpu_custom_call.1} parent=1 // pred_region
      %104 = dma.done [#allocation10], 4096
    $region45: #{tpu_custom_call.1} parent=1 // pred_fallthru
      _
    // Predicated region
    $region46: #{tpu_custom_call.1} parent=1 // pred_check
      _
    $region47: #{tpu_custom_call.1} parent=1 // pred_check_branch
      %106 = sbr.rel (0) target = $region49
    $region48: #{tpu_custom_call.1} parent=1 // pred_region
      %107 = dma.done [#allocation10], 16
    $region49: #{tpu_custom_call.1} parent=1 // pred_fallthru
      _
    // Predicated region
    $region50: #{tpu_custom_call.1} parent=1 // pred_check
      _
    $region51: #{tpu_custom_call.1} parent=1 // pred_check_branch
      %109 = sbr.rel (0) target = $region53
    $region52: #{tpu_custom_call.1} parent=1 // pred_region
      %110 = dma.done [#allocation13], 16
    $region53: #{tpu_custom_call.1} parent=1 // pred_fallthru
      _
    // Predicated region
    $region54: #{tpu_custom_call.1} parent=1 // pred_check
      _
    $region55: #{tpu_custom_call.1} parent=1 // pred_check_branch
      %112 = sbr.rel (0) target = $region57
    $region56: #{tpu_custom_call.1} parent=1 // pred_region
      %113 = dma.done [#allocation13], 16
    $region57: #{tpu_custom_call.1} parent=1 // pred_fallthru
      _
    %p115 = scmp.eq.s32.totalorder 0, 0
    // Predicated region
    $region58: #{tpu_custom_call.1} parent=1 // pred_check
      %p116 = pneg %p115
    $region59: #{tpu_custom_call.1} parent=1 // pred_check_branch
      %118 = sbr.rel (%p116) target = $region61
    $region60: #{tpu_custom_call.1} parent=1 // pred_region
      %119 = vst [vmem:[#allocation2] sm:$0xff] 0.0
      %120 = vst [vmem:[#allocation2 + $0x8] sm:$0xff] 0.0
    $region61: #{tpu_custom_call.1} parent=1 // pred_fallthru
      _
    %v121 = vld [vmem:[#allocation3] sm:$0xff]
    %v122 = vld [vmem:[#allocation3 + $0x8] sm:$0xff]
    %v123 = vpack.c.bf16 %v122, %v121
    %v124 = vld [vmem:[#allocation6] sm:$0xff]
    %v125 = vld [vmem:[#allocation6 + $0x8] sm:$0xff]
    %v126 = vld [vmem:[#allocation6 + $0x10] sm:$0xff]
    %v127 = vld [vmem:[#allocation6 + $0x18] sm:$0xff]
    %v128 = vld [vmem:[#allocation6 + $0x20] sm:$0xff]
    %v129 = vld [vmem:[#allocation6 + $0x28] sm:$0xff]
    %v130 = vld [vmem:[#allocation6 + $0x30] sm:$0xff]
    %v131 = vld [vmem:[#allocation6 + $0x38] sm:$0xff]
    %v132 = vld [vmem:[#allocation6 + $0x40] sm:$0xff]
    %v133 = vld [vmem:[#allocation6 + $0x48] sm:$0xff]
    %v134 = vld [vmem:[#allocation6 + $0x50] sm:$0xff]
    %v135 = vld [vmem:[#allocation6 + $0x58] sm:$0xff]
    %v136 = vld [vmem:[#allocation6 + $0x60] sm:$0xff]
    %v137 = vld [vmem:[#allocation6 + $0x68] sm:$0xff]
    %v138 = vld [vmem:[#allocation6 + $0x70] sm:$0xff]
    %v139 = vld [vmem:[#allocation6 + $0x78] sm:$0xff]
    %v140 = vld [vmem:[#allocation6 + $0x80] sm:$0xff]
    %v141 = vld [vmem:[#allocation6 + $0x88] sm:$0xff]
    %v142 = vld [vmem:[#allocation6 + $0x90] sm:$0xff]
    %v143 = vld [vmem:[#allocation6 + $0x98] sm:$0xff]
    %v144 = vld [vmem:[#allocation6 + $0xa0] sm:$0xff]
    %v145 = vld [vmem:[#allocation6 + $0xa8] sm:$0xff]
    %v146 = vld [vmem:[#allocation6 + $0xb0] sm:$0xff]
    %v147 = vld [vmem:[#allocation6 + $0xb8] sm:$0xff]
    %v148 = vld [vmem:[#allocation6 + $0xc0] sm:$0xff]
    %v149 = vld [vmem:[#allocation6 + $0xc8] sm:$0xff]
    %v150 = vld [vmem:[#allocation6 + $0xd0] sm:$0xff]
    %v151 = vld [vmem:[#allocation6 + $0xd8] sm:$0xff]
    %v152 = vld [vmem:[#allocation6 + $0xe0] sm:$0xff]
    %v153 = vld [vmem:[#allocation6 + $0xe8] sm:$0xff]
    %v154 = vld [vmem:[#allocation6 + $0xf0] sm:$0xff]
    %v155 = vld [vmem:[#allocation6 + $0xf8] sm:$0xff]
    %v156 = vld [vmem:[#allocation8] sm:$0xf]
    %v158 = vlaneseq
    %v159 = vshrl.u32 %v158, 7
    %v160 = vsub.s32 0, %v159
    %v161 = vrot.slane %v156, %v160
    %v162 = vlaneseq
    %v163 = vshrl.u32 %v162, 7
    %v164 = vsub.s32 1, %v163
    %v165 = vrot.slane %v156, %v164
    %v166 = vlaneseq
    %v167 = vshrl.u32 %v166, 7
    %v168 = vsub.s32 2, %v167
    %v169 = vrot.slane %v156, %v168
    %v170 = vlaneseq
    %v171 = vshrl.u32 %v170, 7
    %v172 = vsub.s32 3, %v171
    %v173 = vrot.slane %v156, %v172
    %v210 = vunpack.c.l.b16 %v124
    %v211 = vunpack.c.h.b16 %v124
    %v212 = vunpack.c.l.b16 %v125
    %v213 = vunpack.c.h.b16 %v125
    %v214 = vunpack.c.l.b16 %v126
    %v215 = vunpack.c.h.b16 %v126
    %v216 = vunpack.c.l.b16 %v127
    %v217 = vunpack.c.h.b16 %v127
    %v218 = vunpack.c.l.b16 %v128
    %v219 = vunpack.c.h.b16 %v128
    %v220 = vunpack.c.l.b16 %v129
    %v221 = vunpack.c.h.b16 %v129
    %v222 = vunpack.c.l.b16 %v130
    %v223 = vunpack.c.h.b16 %v130
    %v224 = vunpack.c.l.b16 %v131
    %v225 = vunpack.c.h.b16 %v131
    %v226 = vunpack.c.l.b16 %v132
    %v227 = vunpack.c.h.b16 %v132
    %v228 = vunpack.c.l.b16 %v133
    %v229 = vunpack.c.h.b16 %v133
    %v230 = vunpack.c.l.b16 %v134
    %v231 = vunpack.c.h.b16 %v134
    %v232 = vunpack.c.l.b16 %v135
    %v233 = vunpack.c.h.b16 %v135
    %v234 = vunpack.c.l.b16 %v136
    %v235 = vunpack.c.h.b16 %v136
    %v236 = vunpack.c.l.b16 %v137
    %v237 = vunpack.c.h.b16 %v137
    %v238 = vunpack.c.l.b16 %v138
    %v239 = vunpack.c.h.b16 %v138
    %v240 = vunpack.c.l.b16 %v139
    %v241 = vunpack.c.h.b16 %v139
    %v242 = vunpack.c.l.b16 %v140
    %v243 = vunpack.c.h.b16 %v140
    %v244 = vunpack.c.l.b16 %v141
    %v245 = vunpack.c.h.b16 %v141
    %v246 = vunpack.c.l.b16 %v142
    %v247 = vunpack.c.h.b16 %v142
    %v248 = vunpack.c.l.b16 %v143
    %v249 = vunpack.c.h.b16 %v143
    %v250 = vunpack.c.l.b16 %v144
    %v251 = vunpack.c.h.b16 %v144
    %v252 = vunpack.c.l.b16 %v145
    %v253 = vunpack.c.h.b16 %v145
    %v254 = vunpack.c.l.b16 %v146
    %v255 = vunpack.c.h.b16 %v146
    %v256 = vunpack.c.l.b16 %v147
    %v257 = vunpack.c.h.b16 %v147
    %v258 = vunpack.c.l.b16 %v148
    %v259 = vunpack.c.h.b16 %v148
    %v260 = vunpack.c.l.b16 %v149
    %v261 = vunpack.c.h.b16 %v149
    %v262 = vunpack.c.l.b16 %v150
    %v263 = vunpack.c.h.b16 %v150
    %v264 = vunpack.c.l.b16 %v151
    %v265 = vunpack.c.h.b16 %v151
    %v266 = vunpack.c.l.b16 %v152
    %v267 = vunpack.c.h.b16 %v152
    %v268 = vunpack.c.l.b16 %v153
    %v269 = vunpack.c.h.b16 %v153
    %v270 = vunpack.c.l.b16 %v154
    %v271 = vunpack.c.h.b16 %v154
    %v272 = vunpack.c.l.b16 %v155
    %v273 = vunpack.c.h.b16 %v155
    %v274 = vpack.c.b16 %v214, %v210
    %v275 = vpack.c.b16 %v215, %v211
    %v276 = vpack.c.b16 %v216, %v212
    %v277 = vpack.c.b16 %v217, %v213
    %v278 = vpack.c.b16 %v222, %v218
    %v279 = vpack.c.b16 %v223, %v219
    %v280 = vpack.c.b16 %v224, %v220
    %v281 = vpack.c.b16 %v225, %v221
    %v282 = vpack.c.b16 %v230, %v226
    %v283 = vpack.c.b16 %v231, %v227
    %v284 = vpack.c.b16 %v232, %v228
    %v285 = vpack.c.b16 %v233, %v229
    %v286 = vpack.c.b16 %v238, %v234
    %v287 = vpack.c.b16 %v239, %v235
    %v288 = vpack.c.b16 %v240, %v236
    %v289 = vpack.c.b16 %v241, %v237
    %v290 = vpack.c.b16 %v246, %v242
    %v291 = vpack.c.b16 %v247, %v243
    %v292 = vpack.c.b16 %v248, %v244
    %v293 = vpack.c.b16 %v249, %v245
    %v294 = vpack.c.b16 %v254, %v250
    %v295 = vpack.c.b16 %v255, %v251
    %v296 = vpack.c.b16 %v256, %v252
    %v297 = vpack.c.b16 %v257, %v253
    %v298 = vpack.c.b16 %v262, %v258
    %v299 = vpack.c.b16 %v263, %v259
    %v300 = vpack.c.b16 %v264, %v260
    %v301 = vpack.c.b16 %v265, %v261
    %v302 = vpack.c.b16 %v270, %v266
    %v303 = vpack.c.b16 %v271, %v267
    %v304 = vpack.c.b16 %v272, %v268
    %v305 = vpack.c.b16 %v273, %v269
    %338 = vmatprep.subr.bf16.mxu0 %v275
    %339 = vmatpush1.bf16.msra.mxu0 %v274
    %340 = vmatprep.subr.bf16.mxu0 %v279
    %341 = vmatpush1.bf16.msra.mxu0 %v278
    %342 = vmatprep.subr.bf16.mxu0 %v283
    %343 = vmatpush1.bf16.msra.mxu0 %v282
    %344 = vmatprep.subr.bf16.mxu0 %v287
    %345 = vmatpush1.bf16.msra.mxu0 %v286
    %346 = vmatprep.subr.bf16.mxu0 %v291
    %347 = vmatpush1.bf16.msra.mxu0 %v290
    %348 = vmatprep.subr.bf16.mxu0 %v295
    %349 = vmatpush1.bf16.msra.mxu0 %v294
    %350 = vmatprep.subr.bf16.mxu0 %v299
    %351 = vmatpush1.bf16.msra.mxu0 %v298
    %352 = vmatprep.subr.bf16.mxu0 %v303
    %353 = vmatpush1.bf16.msra.mxu0 %v302
    %354 = vmatprep.subr.bf16.mxu0 0
    %355 = vmatpush1.bf16.msra.mxu0 0
    %356 = vmatprep.subr.bf16.mxu0 0
    %357 = vmatpush1.bf16.msra.mxu0 0
    %358 = vmatprep.subr.bf16.mxu0 0
    %359 = vmatpush1.bf16.msra.mxu0 0
    %360 = vmatprep.subr.bf16.mxu0 0
    %361 = vmatpush1.bf16.msra.mxu0 0
    %362 = vmatprep.subr.bf16.mxu0 0
    %363 = vmatpush1.bf16.msra.mxu0 0
    %364 = vmatprep.subr.bf16.mxu0 0
    %365 = vmatpush1.bf16.msra.mxu0 0
    %366 = vmatprep.subr.bf16.mxu0 0
    %367 = vmatpush1.bf16.msra.mxu0 0
    %368 = vmatprep.subr.bf16.mxu0 0
    %369 = vmatpush1.bf16.msra.mxu0 0
    %370 = vmatprep.mubr.bf16.mxu0 0
    %371 = vmatmul.mubr.bf16.gmra.mrb[0].mxu0 %v123
    %v372 = vpop.f32.mrb[0].mxu0
    %v373 = vadd.f32 %v161, %v372
    %v374 = vpop.f32.mrb[0].mxu0
    %v375 = vadd.f32 %v165, %v374
    %v376 = vpop.f32.mrb[0].mxu0
    %v377 = vadd.f32 %v161, %v376
    %v378 = vpop.f32.mrb[0].mxu0
    %v379 = vadd.f32 %v165, %v378
    %380 = vdwg.mxu0
    %381 = vmatprep.subr.bf16.mxu0 %v277
    %382 = vmatpush1.bf16.msra.mxu0 %v276
    %383 = vmatprep.subr.bf16.mxu0 %v281
    %384 = vmatpush1.bf16.msra.mxu0 %v280
    %385 = vmatprep.subr.bf16.mxu0 %v285
    %386 = vmatpush1.bf16.msra.mxu0 %v284
    %387 = vmatprep.subr.bf16.mxu0 %v289
    %388 = vmatpush1.bf16.msra.mxu0 %v288
    %389 = vmatprep.subr.bf16.mxu0 %v293
    %390 = vmatpush1.bf16.msra.mxu0 %v292
    %391 = vmatprep.subr.bf16.mxu0 %v297
    %392 = vmatpush1.bf16.msra.mxu0 %v296
    %393 = vmatprep.subr.bf16.mxu0 %v301
    %394 = vmatpush1.bf16.msra.mxu0 %v300
    %395 = vmatprep.subr.bf16.mxu0 %v305
    %396 = vmatpush1.bf16.msra.mxu0 %v304
    %397 = vmatprep.subr.bf16.mxu0 0
    %398 = vmatpush1.bf16.msra.mxu0 0
    %399 = vmatprep.subr.bf16.mxu0 0
    %400 = vmatpush1.bf16.msra.mxu0 0
    %401 = vmatprep.subr.bf16.mxu0 0
    %402 = vmatpush1.bf16.msra.mxu0 0
    %403 = vmatprep.subr.bf16.mxu0 0
    %404 = vmatpush1.bf16.msra.mxu0 0
    %405 = vmatprep.subr.bf16.mxu0 0
    %406 = vmatpush1.bf16.msra.mxu0 0
    %407 = vmatprep.subr.bf16.mxu0 0
    %408 = vmatpush1.bf16.msra.mxu0 0
    %409 = vmatprep.subr.bf16.mxu0 0
    %410 = vmatpush1.bf16.msra.mxu0 0
    %411 = vmatprep.subr.bf16.mxu0 0
    %412 = vmatpush1.bf16.msra.mxu0 0
    %413 = vmatprep.mubr.bf16.mxu0 0
    %414 = vmatmul.mubr.bf16.gmra.mrb[0].mxu0 %v123
    %v415 = vpop.f32.mrb[0].mxu0
    %v416 = vadd.f32 %v169, %v415
    %v417 = vpop.f32.mrb[0].mxu0
    %v418 = vadd.f32 %v173, %v417
    %v419 = vpop.f32.mrb[0].mxu0
    %v420 = vadd.f32 %v169, %v419
    %v421 = vpop.f32.mrb[0].mxu0
    %v422 = vadd.f32 %v173, %v421
    %423 = vdwg.mxu0
    %v424 = vmul.f32 %v373, 0.5
    %v425 = vmul.f32 %v375, 0.5
    %v426 = vmul.f32 %v416, 0.5
    %v427 = vmul.f32 %v418, 0.5
    %v428 = vmul.f32 %v377, 0.5
    %v429 = vmul.f32 %v379, 0.5
    %v430 = vmul.f32 %v420, 0.5
    %v431 = vmul.f32 %v422, 0.5
    %v432 = vmul.f32 %v373, 0.044715
    %v433 = vmul.f32 %v375, 0.044715
    %v434 = vmul.f32 %v416, 0.044715
    %v435 = vmul.f32 %v418, 0.044715
    %v436 = vmul.f32 %v377, 0.044715
    %v437 = vmul.f32 %v379, 0.044715
    %v438 = vmul.f32 %v420, 0.044715
    %v439 = vmul.f32 %v422, 0.044715
    %v440 = vmul.f32 %v432, %v373
    %v441 = vmul.f32 %v433, %v375
    %v442 = vmul.f32 %v434, %v416
    %v443 = vmul.f32 %v435, %v418
    %v444 = vmul.f32 %v436, %v377
    %v445 = vmul.f32 %v437, %v379
    %v446 = vmul.f32 %v438, %v420
    %v447 = vmul.f32 %v439, %v422
    %v448 = vmul.f32 %v440, %v373
    %v449 = vmul.f32 %v441, %v375
    %v450 = vmul.f32 %v442, %v416
    %v451 = vmul.f32 %v443, %v418
    %v452 = vmul.f32 %v444, %v377
    %v453 = vmul.f32 %v445, %v379
    %v454 = vmul.f32 %v446, %v420
    %v455 = vmul.f32 %v447, %v422
    %v456 = vadd.f32 %v373, %v448
    %v457 = vadd.f32 %v375, %v449
    %v458 = vadd.f32 %v416, %v450
    %v459 = vadd.f32 %v418, %v451
    %v460 = vadd.f32 %v377, %v452
    %v461 = vadd.f32 %v379, %v453
    %v462 = vadd.f32 %v420, %v454
    %v463 = vadd.f32 %v422, %v455
    %v464 = vmul.f32 %v456, 0.7978846
    %v465 = vmul.f32 %v457, 0.7978846
    %v466 = vmul.f32 %v458, 0.7978846
    %v467 = vmul.f32 %v459, 0.7978846
    %v468 = vmul.f32 %v460, 0.7978846
    %v469 = vmul.f32 %v461, 0.7978846
    %v470 = vmul.f32 %v462, 0.7978846
    %v471 = vmul.f32 %v463, 0.7978846
    %v472 = vtanh.pop %v464
    %v473 = vtanh.pop %v465
    %v474 = vtanh.pop %v466
    %v475 = vtanh.pop %v467
    %v476 = vtanh.pop %v468
    %v477 = vtanh.pop %v469
    %v478 = vtanh.pop %v470
    %v479 = vtanh.pop %v471
    %v480 = vadd.f32 %v472, 1.0
    %v481 = vadd.f32 %v473, 1.0
    %v482 = vadd.f32 %v474, 1.0
    %v483 = vadd.f32 %v475, 1.0
    %v484 = vadd.f32 %v476, 1.0
    %v485 = vadd.f32 %v477, 1.0
    %v486 = vadd.f32 %v478, 1.0
    %v487 = vadd.f32 %v479, 1.0
    %v488 = vmul.f32 %v424, %v480
    %v489 = vmul.f32 %v425, %v481
    %v490 = vmul.f32 %v426, %v482
    %v491 = vmul.f32 %v427, %v483
    %v492 = vmul.f32 %v428, %v484
    %v493 = vmul.f32 %v429, %v485
    %v494 = vmul.f32 %v430, %v486
    %v495 = vmul.f32 %v431, %v487
    %v496 = vld [vmem:[#allocation2] sm:$0xff]
    %v497 = vld [vmem:[#allocation2 + $0x8] sm:$0xff]
    %v498 = vpack.c.bf16 %v492, %v488
    %v499 = vpack.c.bf16 %v493, %v489
    %v500 = vpack.c.bf16 %v494, %v490
    %v501 = vpack.c.bf16 %v495, %v491
    %v502 = vld [vmem:[#allocation9] sm:$0xf]
    %v503 = vld [vmem:[#allocation9 + $0x4] sm:$0xf]
    %v504 = vld [vmem:[#allocation9 + $0x8] sm:$0xf]
    %v505 = vld [vmem:[#allocation9 + $0xc] sm:$0xf]
    %v506 = vld [vmem:[#allocation9 + $0x10] sm:$0xf]
    %v507 = vld [vmem:[#allocation9 + $0x14] sm:$0xf]
    %v508 = vld [vmem:[#allocation9 + $0x18] sm:$0xf]
    %v509 = vld [vmem:[#allocation9 + $0x1c] sm:$0xf]
    %v510 = vld [vmem:[#allocation9 + $0x20] sm:$0xf]
    %v511 = vld [vmem:[#allocation9 + $0x24] sm:$0xf]
    %v512 = vld [vmem:[#allocation9 + $0x28] sm:$0xf]
    %v513 = vld [vmem:[#allocation9 + $0x2c] sm:$0xf]
    %v514 = vld [vmem:[#allocation9 + $0x30] sm:$0xf]
    %v515 = vld [vmem:[#allocation9 + $0x34] sm:$0xf]
    %v516 = vld [vmem:[#allocation9 + $0x38] sm:$0xf]
    %v517 = vld [vmem:[#allocation9 + $0x3c] sm:$0xf]
    %v518 = vld [vmem:[#allocation9 + $0x40] sm:$0xf]
    %v519 = vld [vmem:[#allocation9 + $0x44] sm:$0xf]
    %v520 = vld [vmem:[#allocation9 + $0x48] sm:$0xf]
    %v521 = vld [vmem:[#allocation9 + $0x4c] sm:$0xf]
    %v522 = vld [vmem:[#allocation9 + $0x50] sm:$0xf]
    %v523 = vld [vmem:[#allocation9 + $0x54] sm:$0xf]
    %v524 = vld [vmem:[#allocation9 + $0x58] sm:$0xf]
    %v525 = vld [vmem:[#allocation9 + $0x5c] sm:$0xf]
    %v526 = vld [vmem:[#allocation9 + $0x60] sm:$0xf]
    %v527 = vld [vmem:[#allocation9 + $0x64] sm:$0xf]
    %v528 = vld [vmem:[#allocation9 + $0x68] sm:$0xf]
    %v529 = vld [vmem:[#allocation9 + $0x6c] sm:$0xf]
    %v530 = vld [vmem:[#allocation9 + $0x70] sm:$0xf]
    %v531 = vld [vmem:[#allocation9 + $0x74] sm:$0xf]
    %v532 = vld [vmem:[#allocation9 + $0x78] sm:$0xf]
    %v533 = vld [vmem:[#allocation9 + $0x7c] sm:$0xf]
    %v534 = vld [vmem:[#allocation9 + $0x80] sm:$0xf]
    %v535 = vld [vmem:[#allocation9 + $0x84] sm:$0xf]
    %v536 = vld [vmem:[#allocation9 + $0x88] sm:$0xf]
    %v537 = vld [vmem:[#allocation9 + $0x8c] sm:$0xf]
    %v538 = vld [vmem:[#allocation9 + $0x90] sm:$0xf]
    %v539 = vld [vmem:[#allocation9 + $0x94] sm:$0xf]
    %v540 = vld [vmem:[#allocation9 + $0x98] sm:$0xf]
    %v541 = vld [vmem:[#allocation9 + $0x9c] sm:$0xf]
    %v542 = vld [vmem:[#allocation9 + $0xa0] sm:$0xf]
    %v543 = vld [vmem:[#allocation9 + $0xa4] sm:$0xf]
    %v544 = vld [vmem:[#allocation9 + $0xa8] sm:$0xf]
    %v545 = vld [vmem:[#allocation9 + $0xac] sm:$0xf]
    %v546 = vld [vmem:[#allocation9 + $0xb0] sm:$0xf]
    %v547 = vld [vmem:[#allocation9 + $0xb4] sm:$0xf]
    %v548 = vld [vmem:[#allocation9 + $0xb8] sm:$0xf]
    %v549 = vld [vmem:[#allocation9 + $0xbc] sm:$0xf]
    %v550 = vld [vmem:[#allocation9 + $0xc0] sm:$0xf]
    %v551 = vld [vmem:[#allocation9 + $0xc4] sm:$0xf]
    %v552 = vld [vmem:[#allocation9 + $0xc8] sm:$0xf]
    %v553 = vld [vmem:[#allocation9 + $0xcc] sm:$0xf]
    %v554 = vld [vmem:[#allocation9 + $0xd0] sm:$0xf]
    %v555 = vld [vmem:[#allocation9 + $0xd4] sm:$0xf]
    %v556 = vld [vmem:[#allocation9 + $0xd8] sm:$0xf]
    %v557 = vld [vmem:[#allocation9 + $0xdc] sm:$0xf]
    %v558 = vld [vmem:[#allocation9 + $0xe0] sm:$0xf]
    %v559 = vld [vmem:[#allocation9 + $0xe4] sm:$0xf]
    %v560 = vld [vmem:[#allocation9 + $0xe8] sm:$0xf]
    %v561 = vld [vmem:[#allocation9 + $0xec] sm:$0xf]
    %v562 = vld [vmem:[#allocation9 + $0xf0] sm:$0xf]
    %v563 = vld [vmem:[#allocation9 + $0xf4] sm:$0xf]
    %v564 = vld [vmem:[#allocation9 + $0xf8] sm:$0xf]
    %v565 = vld [vmem:[#allocation9 + $0xfc] sm:$0xf]
    %v630 = vunpack.c.l.b16 %v502
    %v631 = vunpack.c.l.b16 %v503
    %v632 = vunpack.c.l.b16 %v504
    %v633 = vunpack.c.l.b16 %v505
    %v634 = vunpack.c.l.b16 %v506
    %v635 = vunpack.c.l.b16 %v507
    %v636 = vunpack.c.l.b16 %v508
    %v637 = vunpack.c.l.b16 %v509
    %v638 = vunpack.c.l.b16 %v510
    %v639 = vunpack.c.l.b16 %v511
    %v640 = vunpack.c.l.b16 %v512
    %v641 = vunpack.c.l.b16 %v513
    %v642 = vunpack.c.l.b16 %v514
    %v643 = vunpack.c.l.b16 %v515
    %v644 = vunpack.c.l.b16 %v516
    %v645 = vunpack.c.l.b16 %v517
    %v646 = vunpack.c.l.b16 %v518
    %v647 = vunpack.c.l.b16 %v519
    %v648 = vunpack.c.l.b16 %v520
    %v649 = vunpack.c.l.b16 %v521
    %v650 = vunpack.c.l.b16 %v522
    %v651 = vunpack.c.l.b16 %v523
    %v652 = vunpack.c.l.b16 %v524
    %v653 = vunpack.c.l.b16 %v525
    %v654 = vunpack.c.l.b16 %v526
    %v655 = vunpack.c.l.b16 %v527
    %v656 = vunpack.c.l.b16 %v528
    %v657 = vunpack.c.l.b16 %v529
    %v658 = vunpack.c.l.b16 %v530
    %v659 = vunpack.c.l.b16 %v531
    %v660 = vunpack.c.l.b16 %v532
    %v661 = vunpack.c.l.b16 %v533
    %v662 = vunpack.c.l.b16 %v534
    %v663 = vunpack.c.l.b16 %v535
    %v664 = vunpack.c.l.b16 %v536
    %v665 = vunpack.c.l.b16 %v537
    %v666 = vunpack.c.l.b16 %v538
    %v667 = vunpack.c.l.b16 %v539
    %v668 = vunpack.c.l.b16 %v540
    %v669 = vunpack.c.l.b16 %v541
    %v670 = vunpack.c.l.b16 %v542
    %v671 = vunpack.c.l.b16 %v543
    %v672 = vunpack.c.l.b16 %v544
    %v673 = vunpack.c.l.b16 %v545
    %v674 = vunpack.c.l.b16 %v546
    %v675 = vunpack.c.l.b16 %v547
    %v676 = vunpack.c.l.b16 %v548
    %v677 = vunpack.c.l.b16 %v549
    %v678 = vunpack.c.l.b16 %v550
    %v679 = vunpack.c.l.b16 %v551
    %v680 = vunpack.c.l.b16 %v552
    %v681 = vunpack.c.l.b16 %v553
    %v682 = vunpack.c.l.b16 %v554
    %v683 = vunpack.c.l.b16 %v555
    %v684 = vunpack.c.l.b16 %v556
    %v685 = vunpack.c.l.b16 %v557
    %v686 = vunpack.c.l.b16 %v558
    %v687 = vunpack.c.l.b16 %v559
    %v688 = vunpack.c.l.b16 %v560
    %v689 = vunpack.c.l.b16 %v561
    %v690 = vunpack.c.l.b16 %v562
    %v691 = vunpack.c.l.b16 %v563
    %v692 = vunpack.c.l.b16 %v564
    %v693 = vunpack.c.l.b16 %v565
    %v694 = vpack.c.b16 %v631, %v630
    %v695 = vpack.c.b16 %v633, %v632
    %v696 = vpack.c.b16 %v635, %v634
    %v697 = vpack.c.b16 %v637, %v636
    %v698 = vpack.c.b16 %v639, %v638
    %v699 = vpack.c.b16 %v641, %v640
    %v700 = vpack.c.b16 %v643, %v642
    %v701 = vpack.c.b16 %v645, %v644
    %v702 = vpack.c.b16 %v647, %v646
    %v703 = vpack.c.b16 %v649, %v648
    %v704 = vpack.c.b16 %v651, %v650
    %v705 = vpack.c.b16 %v653, %v652
    %v706 = vpack.c.b16 %v655, %v654
    %v707 = vpack.c.b16 %v657, %v656
    %v708 = vpack.c.b16 %v659, %v658
    %v709 = vpack.c.b16 %v661, %v660
    %v710 = vpack.c.b16 %v663, %v662
    %v711 = vpack.c.b16 %v665, %v664
    %v712 = vpack.c.b16 %v667, %v666
    %v713 = vpack.c.b16 %v669, %v668
    %v714 = vpack.c.b16 %v671, %v670
    %v715 = vpack.c.b16 %v673, %v672
    %v716 = vpack.c.b16 %v675, %v674
    %v717 = vpack.c.b16 %v677, %v676
    %v718 = vpack.c.b16 %v679, %v678
    %v719 = vpack.c.b16 %v681, %v680
    %v720 = vpack.c.b16 %v683, %v682
    %v721 = vpack.c.b16 %v685, %v684
    %v722 = vpack.c.b16 %v687, %v686
    %v723 = vpack.c.b16 %v689, %v688
    %v724 = vpack.c.b16 %v691, %v690
    %v725 = vpack.c.b16 %v693, %v692
    %758 = vmatprep.subr.bf16.mxu0 0
    %759 = vmatpush1.bf16.msra.mxu0 %v694
    %760 = vmatprep.subr.bf16.mxu0 0
    %761 = vmatpush1.bf16.msra.mxu0 %v695
    %762 = vmatprep.subr.bf16.mxu0 0
    %763 = vmatpush1.bf16.msra.mxu0 %v696
    %764 = vmatprep.subr.bf16.mxu0 0
    %765 = vmatpush1.bf16.msra.mxu0 %v697
    %766 = vmatprep.subr.bf16.mxu0 0
    %767 = vmatpush1.bf16.msra.mxu0 %v698
    %768 = vmatprep.subr.bf16.mxu0 0
    %769 = vmatpush1.bf16.msra.mxu0 %v699
    %770 = vmatprep.subr.bf16.mxu0 0
    %771 = vmatpush1.bf16.msra.mxu0 %v700
    %772 = vmatprep.subr.bf16.mxu0 0
    %773 = vmatpush1.bf16.msra.mxu0 %v701
    %774 = vmatprep.subr.bf16.mxu0 0
    %775 = vmatpush1.bf16.msra.mxu0 %v702
    %776 = vmatprep.subr.bf16.mxu0 0
    %777 = vmatpush1.bf16.msra.mxu0 %v703
    %778 = vmatprep.subr.bf16.mxu0 0
    %779 = vmatpush1.bf16.msra.mxu0 %v704
    %780 = vmatprep.subr.bf16.mxu0 0
    %781 = vmatpush1.bf16.msra.mxu0 %v705
    %782 = vmatprep.subr.bf16.mxu0 0
    %783 = vmatpush1.bf16.msra.mxu0 %v706
    %784 = vmatprep.subr.bf16.mxu0 0
    %785 = vmatpush1.bf16.msra.mxu0 %v707
    %786 = vmatprep.subr.bf16.mxu0 0
    %787 = vmatpush1.bf16.msra.mxu0 %v708
    %788 = vmatprep.subr.bf16.mxu0 0
    %789 = vmatpush1.bf16.msra.mxu0 %v709
    %790 = vmatprep.mubr.bf16.mxu0 %v499
    %791 = vmatmul.mubr.bf16.gmra.mrb[0].mxu0 %v498
    %v792 = vpop.f32.mrb[0].mxu0
    %v793 = vadd.f32 0.0, %v792
    %v794 = vpop.f32.mrb[0].mxu0
    %v795 = vpop.f32.mrb[0].mxu0
    %v796 = vadd.f32 0.0, %v795
    %v797 = vpop.f32.mrb[0].mxu0
    %798 = vdwg.mxu0
    %799 = vmatprep.subr.bf16.mxu0 0
    %800 = vmatpush1.bf16.msra.mxu0 %v710
    %801 = vmatprep.subr.bf16.mxu0 0
    %802 = vmatpush1.bf16.msra.mxu0 %v711
    %803 = vmatprep.subr.bf16.mxu0 0
    %804 = vmatpush1.bf16.msra.mxu0 %v712
    %805 = vmatprep.subr.bf16.mxu0 0
    %806 = vmatpush1.bf16.msra.mxu0 %v713
    %807 = vmatprep.subr.bf16.mxu0 0
    %808 = vmatpush1.bf16.msra.mxu0 %v714
    %809 = vmatprep.subr.bf16.mxu0 0
    %810 = vmatpush1.bf16.msra.mxu0 %v715
    %811 = vmatprep.subr.bf16.mxu0 0
    %812 = vmatpush1.bf16.msra.mxu0 %v716
    %813 = vmatprep.subr.bf16.mxu0 0
    %814 = vmatpush1.bf16.msra.mxu0 %v717
    %815 = vmatprep.subr.bf16.mxu0 0
    %816 = vmatpush1.bf16.msra.mxu0 %v718
    %817 = vmatprep.subr.bf16.mxu0 0
    %818 = vmatpush1.bf16.msra.mxu0 %v719
    %819 = vmatprep.subr.bf16.mxu0 0
    %820 = vmatpush1.bf16.msra.mxu0 %v720
    %821 = vmatprep.subr.bf16.mxu0 0
    %822 = vmatpush1.bf16.msra.mxu0 %v721
    %823 = vmatprep.subr.bf16.mxu0 0
    %824 = vmatpush1.bf16.msra.mxu0 %v722
    %825 = vmatprep.subr.bf16.mxu0 0
    %826 = vmatpush1.bf16.msra.mxu0 %v723
    %827 = vmatprep.subr.bf16.mxu0 0
    %828 = vmatpush1.bf16.msra.mxu0 %v724
    %829 = vmatprep.subr.bf16.mxu0 0
    %830 = vmatpush1.bf16.msra.mxu0 %v725
    %831 = vmatprep.mubr.bf16.mxu0 %v501
    %832 = vmatmul.mubr.bf16.gmra.mrb[0].mxu0 %v500
    %v833 = vpop.f32.mrb[0].mxu0
    %v834 = vadd.f32 %v793, %v833
    %v835 = vpop.f32.mrb[0].mxu0
    %v836 = vpop.f32.mrb[0].mxu0
    %v837 = vadd.f32 %v796, %v836
    %v838 = vpop.f32.mrb[0].mxu0
    %839 = vdwg.mxu0
    %v840 = vadd.f32 %v496, %v834
    %v841 = vadd.f32 %v497, %v837
    %842 = vst [vmem:[#allocation2] sm:$0xff] %v840
    %843 = vst [vmem:[#allocation2 + $0x8] sm:$0xff] %v841
    // Predicated region
    $region62: #{tpu_custom_call.1} parent=1 // pred_check
      %p844 = pneg %p115
    $region63: #{tpu_custom_call.1} parent=1 // pred_check_branch
      %846 = sbr.rel (%p844) target = $region65
    $region64: #{tpu_custom_call.1} parent=1 // pred_region
      %v847 = vld [vmem:[#allocation2] sm:$0xff]
      %v848 = vld [vmem:[#allocation2 + $0x8] sm:$0xff]
      %v849 = vld [vmem:[#allocation11] sm:$0x1]
      %v851 = vlaneseq
      %v852 = vshrl.u32 %v851, 7
      %v853 = vsub.s32 0, %v852
      %v854 = vrot.slane %v849, %v853
      %v856 = vadd.f32 %v847, %v854
      %v857 = vadd.f32 %v848, %v854
      %v858 = vld [vmem:[#allocation3] sm:$0xff]
      %v859 = vld [vmem:[#allocation3 + $0x8] sm:$0xff]
      %v860 = vadd.f32 %v856, %v858
      %v861 = vadd.f32 %v857, %v859
      %862 = vadd.xlane.f32.xlu0 %v860
      %v863 = vpop.xlane.xlu0 %862
      %864 = vadd.xlane.f32.xlu0 %v861
      %v865 = vpop.xlane.xlu0 %864
      %v866 = vmul.f32 %v860, %v860
      %v867 = vmul.f32 %v861, %v861
      %868 = vadd.xlane.f32.xlu0 %v866
      %v869 = vpop.xlane.xlu0 %868
      %870 = vadd.xlane.f32.xlu0 %v867
      %v871 = vpop.xlane.xlu0 %870
      %v872 = vmul.f32 %v863, 0.0078125
      %v873 = vmul.f32 %v865, 0.0078125
      %v874 = vmul.f32 %v869, 0.0078125
      %v875 = vmul.f32 %v871, 0.0078125
      %v876 = vmul.f32 %v872, %v872
      %v877 = vmul.f32 %v873, %v873
      %v878 = vsub.f32 %v874, %v876
      %v879 = vsub.f32 %v875, %v877
      %v880 = vmax.f32 %v878, 0.0
      %v881 = vmax.f32 %v879, 0.0
      %v882 = vsub.f32 %v860, %v872
      %v883 = vsub.f32 %v861, %v873
      %v884 = vadd.f32 %v880, 1e-12
      %v885 = vadd.f32 %v881, 1e-12
      %v886 = vrsqrt.pop %v884
      %v887 = vrsqrt.pop %v885
      %v888 = vmul.f32 %v882, %v886
      %v889 = vmul.f32 %v883, %v887
      %v890 = vld [vmem:[#allocation12] sm:$0x1]
      %v892 = vlaneseq
      %v893 = vshrl.u32 %v892, 7
      %v894 = vsub.s32 0, %v893
      %v895 = vrot.slane %v890, %v894
      %v897 = vmul.f32 %v888, %v895
      %v898 = vmul.f32 %v889, %v895
      %v899 = vld [vmem:[#allocation14] sm:$0x1]
      %v901 = vlaneseq
      %v902 = vshrl.u32 %v901, 7
      %v903 = vsub.s32 0, %v902
      %v904 = vrot.slane %v899, %v903
      %v906 = vadd.f32 %v897, %v904
      %v907 = vadd.f32 %v898, %v904
      %908 = vst [vmem:[#allocation15] sm:$0xff] %v906
      %909 = vst [vmem:[#allocation15 + $0x8] sm:$0xff] %v907
    $region65: #{tpu_custom_call.1} parent=1 // pred_fallthru
      _
    // Predicated region
    $region66: #{tpu_custom_call.1} parent=1 // pred_check
      _
    $region67: #{tpu_custom_call.1} parent=1 // pred_check_branch
      %911 = sbr.rel (0) target = $region69
    $region68: #{tpu_custom_call.1} parent=1 // pred_region
      %s913 = ssub.s32 256, 256
      %914 = vsyncadd [#allocation5], %s913
      %s915 = sshll.u32 [#allocation15], 4
      %s916 = int_to_ptr.vmem [resolvable:$true] %s915
      %921 = dma.vmem_to_hbm [thread:$0]  %s916, 256, %s7, [#allocation5], 128, 128, 8
    $region69: #{tpu_custom_call.1} parent=1 // pred_fallthru
      _
    // Predicated region
    $region70: #{tpu_custom_call.1} parent=1 // pred_check
      _
    $region71: #{tpu_custom_call.1} parent=1 // pred_check_branch
      %923 = sbr.rel (0) target = $region73
    $region72: #{tpu_custom_call.1} parent=1 // pred_region
      %924 = dma.done [#allocation5], 256
    $region73: #{tpu_custom_call.1} parent=1 // pred_fallthru
      _
    %925 = vsyncpa [#allocation4], 1
    %926 = vsyncpa [#allocation7], 1
    %927 = vsyncpa [#allocation10], 1
    %928 = vsyncpa [#allocation13], 1
    %929 = vsyncpa [#allocation5], 1

// kernel: tpu_custom_call.1
$region0: #{tpu_custom_call.1}
  #allocation0 [shape = 'u32[]', space=smem, size = 0x4, offset = 0x4, fixed_abs, tag = 'smem constant byte address 0x4 - core index']
  #allocation1 [shape = 'u32[144,128]{1,0:T(1,128)}', space=vmem, size = 0x12000, scoped, tag = 'internal scratch']
  #allocation2 [shape = 'f32[16,128]{1,0:T(8,128)}', space=vmem, size = 0x2000, scoped, tag = 'scratch operand']
  %s0 = inlined_call_operand.hbm [shape: f32[16,128], index: 0, kind: input, shape index: {}]
  %s1 = inlined_call_operand.hbm [shape: bf16[128,512], index: 1, kind: input, shape index: {}]
  %s2 = inlined_call_operand.hbm [shape: f32[1,512], index: 2, kind: input, shape index: {}]
  %s3 = inlined_call_operand.hbm [shape: bf16[512,128], index: 3, kind: input, shape index: {}]
  %s4 = inlined_call_operand.hbm [shape: f32[1,128], index: 4, kind: input, shape index: {}]
  %s5 = inlined_call_operand.hbm [shape: f32[1,128], index: 5, kind: input, shape index: {}]
  %s6 = inlined_call_operand.hbm [shape: f32[1,128], index: 6, kind: input, shape index: {}]
  %s7 = inlined_call_operand.hbm [shape: f32[16,128], index: 7, kind: output, shape index: {}]
  %s8 = sld [smem:[#allocation0]]
  $region74: #{tpu_custom_call.1} parent=0
    _
  %s10 = ssub.s32 1, %s8
  %s11 = scalar_select 0, %s10, %s8
  $region1: #{tpu_custom_call.1} parent=0
    #allocation3 [shape = 'u8[8192]{0}', space=vmem, size = 0x2000, scoped, tag = 'input window, operand 0, single buffered']
    #allocation4 [shape = 's32[1]{0}', space=sflag, size = 0x4, scoped, tag = 'scoped memory for tpu_custom_call.1']
    #allocation5 [shape = 's32[1]{0}', space=sflag, size = 0x4, scoped, tag = 'scoped memory for tpu_custom_call.1']
    #allocation6 [shape = 'u8[131072]{0}', space=vmem, size = 0x20000, scoped, tag = 'input window, operand 1, single buffered']
    #allocation7 [shape = 's32[1]{0}', space=sflag, size = 0x4, scoped, tag = 'scoped memory for tpu_custom_call.1']
    #allocation8 [shape = 'u8[2048]{0}', space=vmem, size = 0x800, scoped, tag = 'input window, operand 2, single buffered']
    #allocation9 [shape = 'u8[131072]{0}', space=vmem, size = 0x20000, scoped, tag = 'input window, operand 3, single buffered']
    #allocation10 [shape = 's32[1]{0}', space=sflag, size = 0x4, scoped, tag = 'scoped memory for tpu_custom_call.1']
    #allocation11 [shape = 'u8[512]{0}', space=vmem, size = 0x400, scoped, tag = 'input window, operand 4, single buffered']
    #allocation12 [shape = 'u8[512]{0}', space=vmem, size = 0x400, scoped, tag = 'input window, operand 5, single buffered']
    #allocation13 [shape = 's32[1]{0}', space=sflag, size = 0x4, scoped, tag = 'scoped memory for tpu_custom_call.1']
    #allocation14 [shape = 'u8[512]{0}', space=vmem, size = 0x400, scoped, tag = 'input window, operand 6, single buffered']
    #allocation15 [shape = 'u8[8192]{0}', space=vmem, size = 0x2000, scoped, tag = 'output window, operand 0, single buffered']
    %12 = vsyncpa [#allocation4], 0
    %13 = vsyncpa [#allocation7], 0
    %14 = vsyncpa [#allocation10], 0
    %15 = vsyncpa [#allocation13], 0
    %16 = vsyncpa [#allocation5], 0
    // Predicated region
    $region2: #{tpu_custom_call.1} parent=1 // pred_check
      _
    $region3: #{tpu_custom_call.1} parent=1 // pred_check_branch
      %18 = sbr.rel (0) target = $region5
    $region4: #{tpu_custom_call.1} parent=1 // pred_region
      %s20 = ssub.s32 256, 256
      %21 = vsyncadd [#allocation4], %s20
      %s22 = sshll.u32 [#allocation3], 4
      %s23 = int_to_ptr.vmem [resolvable:$true] %s22
      %28 = dma.hbm_to_vmem [thread:$0]  %s0, 256, %s23, [#allocation4], 128, 128, 8
    $region5: #{tpu_custom_call.1} parent=1 // pred_fallthru
      _
    // Predicated region
    $region6: #{tpu_custom_call.1} parent=1 // pred_check
      _
    $region7: #{tpu_custom_call.1} parent=1 // pred_check_branch
      %30 = sbr.rel (0) target = $region9
    $region8: #{tpu_custom_call.1} parent=1 // pred_region
      %s32 = ssub.s32 4096, 4096
      %33 = vsyncadd [#allocation7], %s32
      %s34 = sshll.u32 [#allocation6], 4
      %s35 = int_to_ptr.vmem [resolvable:$true] %s34
      %40 = dma.hbm_to_vmem [thread:$0]  %s1, 4096, %s35, [#allocation7], 256, 256, 16
    $region9: #{tpu_custom_call.1} parent=1 // pred_fallthru
      _
    // Predicated region
    $region10: #{tpu_custom_call.1} parent=1 // pred_check
      _
    $region11: #{tpu_custom_call.1} parent=1 // pred_check_branch
      %42 = sbr.rel (0) target = $region13
    $region12: #{tpu_custom_call.1} parent=1 // pred_region
      %s44 = ssub.s32 64, 64
      %45 = vsyncadd [#allocation7], %s44
      %s47 = sshll.u32 [#allocation8], 4
      %s48 = int_to_ptr.vmem [resolvable:$true] %s47
      %50 = dma.hbm_to_vmem [thread:$0]  %s2, 64, %s48, [#allocation7]
    $region13: #{tpu_custom_call.1} parent=1 // pred_fallthru
      _
    // Predicated region
    $region14: #{tpu_custom_call.1} parent=1 // pred_check
      _
    $region15: #{tpu_custom_call.1} parent=1 // pred_check_branch
      %52 = sbr.rel (0) target = $region17
    $region16: #{tpu_custom_call.1} parent=1 // pred_region
      %s54 = ssub.s32 4096, 4096
      %55 = vsyncadd [#allocation10], %s54
      %s56 = sshll.u32 [#allocation9], 4
      %s57 = int_to_ptr.vmem [resolvable:$true] %s56
      %62 = dma.hbm_to_vmem [thread:$0]  %s3, 4096, %s57, [#allocation10], 64, 64, 4
    $region17: #{tpu_custom_call.1} parent=1 // pred_fallthru
      _
    // Predicated region
    $region18: #{tpu_custom_call.1} parent=1 // pred_check
      _
    $region19: #{tpu_custom_call.1} parent=1 // pred_check_branch
      %64 = sbr.rel (0) target = $region21
    $region20: #{tpu_custom_call.1} parent=1 // pred_region
      %s66 = ssub.s32 16, 16
      %67 = vsyncadd [#allocation10], %s66
      %s69 = sshll.u32 [#allocation11], 4
      %s70 = int_to_ptr.vmem [resolvable:$true] %s69
      %72 = dma.hbm_to_vmem [thread:$0]  %s4, 16, %s70, [#allocation10]
    $region21: #{tpu_custom_call.1} parent=1 // pred_fallthru
      _
    // Predicated region
    $region22: #{tpu_custom_call.1} parent=1 // pred_check
      _
    $region23: #{tpu_custom_call.1} parent=1 // pred_check_branch
      %74 = sbr.rel (0) target = $region25
    $region24: #{tpu_custom_call.1} parent=1 // pred_region
      %s76 = ssub.s32 16, 16
      %77 = vsyncadd [#allocation13], %s76
      %s79 = sshll.u32 [#allocation12], 4
      %s80 = int_to_ptr.vmem [resolvable:$true] %s79
      %82 = dma.hbm_to_vmem [thread:$0]  %s5, 16, %s80, [#allocation13]
    $region25: #{tpu_custom_call.1} parent=1 // pred_fallthru
      _
    // Predicated region
    $region26: #{tpu_custom_call.1} parent=1 // pred_check
      _
    $region27: #{tpu_custom_call.1} parent=1 // pred_check_branch
      %84 = sbr.rel (0) target = $region29
    $region28: #{tpu_custom_call.1} parent=1 // pred_region
      %s86 = ssub.s32 16, 16
      %87 = vsyncadd [#allocation13], %s86
      %s89 = sshll.u32 [#allocation14], 4
      %s90 = int_to_ptr.vmem [resolvable:$true] %s89
      %92 = dma.hbm_to_vmem [thread:$0]  %s6, 16, %s90, [#allocation13]
    $region29: #{tpu_custom_call.1} parent=1 // pred_fallthru
      _
    // Predicated region
    $region30: #{tpu_custom_call.1} parent=1 // pred_check
      _
    $region31: #{tpu_custom_call.1} parent=1 // pred_check_branch
      %94 = sbr.rel (0) target = $region33
    $region32: #{tpu_custom_call.1} parent=1 // pred_region
      %95 = dma.done [#allocation4], 256
    $region33: #{tpu_custom_call.1} parent=1 // pred_fallthru
      _
    // Predicated region
    $region34: #{tpu_custom_call.1} parent=1 // pred_check
      _
    $region35: #{tpu_custom_call.1} parent=1 // pred_check_branch
      %97 = sbr.rel (0) target = $region37
    $region36: #{tpu_custom_call.1} parent=1 // pred_region
      %98 = dma.done [#allocation7], 4096
    $region37: #{tpu_custom_call.1} parent=1 // pred_fallthru
      _
    // Predicated region
    $region38: #{tpu_custom_call.1} parent=1 // pred_check
      _
    $region39: #{tpu_custom_call.1} parent=1 // pred_check_branch
      %100 = sbr.rel (0) target = $region41
    $region40: #{tpu_custom_call.1} parent=1 // pred_region
      %101 = dma.done [#allocation7], 64
    $region41: #{tpu_custom_call.1} parent=1 // pred_fallthru
      _
    // Predicated region
    $region42: #{tpu_custom_call.1} parent=1 // pred_check
      _
    $region43: #{tpu_custom_call.1} parent=1 // pred_check_branch
      %103 = sbr.rel (0) target = $region45
    $region44: #{tpu_custom_call.1} parent=1 // pred_region
      %104 = dma.done [#allocation10], 4096
    $region45: #{tpu_custom_call.1} parent=1 // pred_fallthru
      _
    // Predicated region
    $region46: #{tpu_custom_call.1} parent=1 // pred_check
      _
    $region47: #{tpu_custom_call.1} parent=1 // pred_check_branch
      %106 = sbr.rel (0) target = $region49
    $region48: #{tpu_custom_call.1} parent=1 // pred_region
      %107 = dma.done [#allocation10], 16
    $region49: #{tpu_custom_call.1} parent=1 // pred_fallthru
      _
    // Predicated region
    $region50: #{tpu_custom_call.1} parent=1 // pred_check
      _
    $region51: #{tpu_custom_call.1} parent=1 // pred_check_branch
      %109 = sbr.rel (0) target = $region53
    $region52: #{tpu_custom_call.1} parent=1 // pred_region
      %110 = dma.done [#allocation13], 16
    $region53: #{tpu_custom_call.1} parent=1 // pred_fallthru
      _
    // Predicated region
    $region54: #{tpu_custom_call.1} parent=1 // pred_check
      _
    $region55: #{tpu_custom_call.1} parent=1 // pred_check_branch
      %112 = sbr.rel (0) target = $region57
    $region56: #{tpu_custom_call.1} parent=1 // pred_region
      %113 = dma.done [#allocation13], 16
    $region57: #{tpu_custom_call.1} parent=1 // pred_fallthru
      _
    %p115 = scmp.eq.s32.totalorder 0, 0
    // Predicated region
    $region58: #{tpu_custom_call.1} parent=1 // pred_check
      %p116 = pneg %p115
    $region59: #{tpu_custom_call.1} parent=1 // pred_check_branch
      %118 = sbr.rel (%p116) target = $region61
    $region60: #{tpu_custom_call.1} parent=1 // pred_region
      %119 = vst [vmem:[#allocation2] sm:$0xff] 0.0
      %120 = vst [vmem:[#allocation2 + $0x8] sm:$0xff] 0.0
    $region61: #{tpu_custom_call.1} parent=1 // pred_fallthru
      _
    %v121 = vld [vmem:[#allocation3] sm:$0xff]
    %v122 = vld [vmem:[#allocation3 + $0x8] sm:$0xff]
    %v123 = vpack.c.bf16 %v122, %v121
    %v124 = vld [vmem:[#allocation6] sm:$0xff]
    %v125 = vld [vmem:[#allocation6 + $0x8] sm:$0xff]
    %v126 = vld [vmem:[#allocation6 + $0x10] sm:$0xff]
    %v127 = vld [vmem:[#allocation6 + $0x18] sm:$0xff]
    %v128 = vld [vmem:[#allocation6 + $0x20] sm:$0xff]
    %v129 = vld [vmem:[#allocation6 + $0x28] sm:$0xff]
    %v130 = vld [vmem:[#allocation6 + $0x30] sm:$0xff]
    %v131 = vld [vmem:[#allocation6 + $0x38] sm:$0xff]
    %v132 = vld [vmem:[#allocation6 + $0x40] sm:$0xff]
    %v133 = vld [vmem:[#allocation6 + $0x48] sm:$0xff]
    %v134 = vld [vmem:[#allocation6 + $0x50] sm:$0xff]
    %v135 = vld [vmem:[#allocation6 + $0x58] sm:$0xff]
    %v136 = vld [vmem:[#allocation6 + $0x60] sm:$0xff]
    %v137 = vld [vmem:[#allocation6 + $0x68] sm:$0xff]
    %v138 = vld [vmem:[#allocation6 + $0x70] sm:$0xff]
    %v139 = vld [vmem:[#allocation6 + $0x78] sm:$0xff]
    %v140 = vld [vmem:[#allocation6 + $0x80] sm:$0xff]
    %v141 = vld [vmem:[#allocation6 + $0x88] sm:$0xff]
    %v142 = vld [vmem:[#allocation6 + $0x90] sm:$0xff]
    %v143 = vld [vmem:[#allocation6 + $0x98] sm:$0xff]
    %v144 = vld [vmem:[#allocation6 + $0xa0] sm:$0xff]
    %v145 = vld [vmem:[#allocation6 + $0xa8] sm:$0xff]
    %v146 = vld [vmem:[#allocation6 + $0xb0] sm:$0xff]
    %v147 = vld [vmem:[#allocation6 + $0xb8] sm:$0xff]
    %v148 = vld [vmem:[#allocation6 + $0xc0] sm:$0xff]
    %v149 = vld [vmem:[#allocation6 + $0xc8] sm:$0xff]
    %v150 = vld [vmem:[#allocation6 + $0xd0] sm:$0xff]
    %v151 = vld [vmem:[#allocation6 + $0xd8] sm:$0xff]
    %v152 = vld [vmem:[#allocation6 + $0xe0] sm:$0xff]
    %v153 = vld [vmem:[#allocation6 + $0xe8] sm:$0xff]
    %v154 = vld [vmem:[#allocation6 + $0xf0] sm:$0xff]
    %v155 = vld [vmem:[#allocation6 + $0xf8] sm:$0xff]
    %v156 = vld [vmem:[#allocation8] sm:$0xf]
    %v158 = vlaneseq
    %v159 = vshrl.u32 %v158, 7
    %v160 = vsub.s32 0, %v159
    %v161 = vrot.slane %v156, %v160
    %v162 = vlaneseq
    %v163 = vshrl.u32 %v162, 7
    %v164 = vsub.s32 1, %v163
    %v165 = vrot.slane %v156, %v164
    %v166 = vlaneseq
    %v167 = vshrl.u32 %v166, 7
    %v168 = vsub.s32 2, %v167
    %v169 = vrot.slane %v156, %v168
    %v170 = vlaneseq
    %v171 = vshrl.u32 %v170, 7
    %v172 = vsub.s32 3, %v171
    %v173 = vrot.slane %v156, %v172
    %v210 = vunpack.c.l.b16 %v124
    %v211 = vunpack.c.h.b16 %v124
    %v212 = vunpack.c.l.b16 %v125
    %v213 = vunpack.c.h.b16 %v125
    %v214 = vunpack.c.l.b16 %v126
    %v215 = vunpack.c.h.b16 %v126
    %v216 = vunpack.c.l.b16 %v127
    %v217 = vunpack.c.h.b16 %v127
    %v218 = vunpack.c.l.b16 %v128
    %v219 = vunpack.c.h.b16 %v128
    %v220 = vunpack.c.l.b16 %v129
    %v221 = vunpack.c.h.b16 %v129
    %v222 = vunpack.c.l.b16 %v130
    %v223 = vunpack.c.h.b16 %v130
    %v224 = vunpack.c.l.b16 %v131
    %v225 = vunpack.c.h.b16 %v131
    %v226 = vunpack.c.l.b16 %v132
    %v227 = vunpack.c.h.b16 %v132
    %v228 = vunpack.c.l.b16 %v133
    %v229 = vunpack.c.h.b16 %v133
    %v230 = vunpack.c.l.b16 %v134
    %v231 = vunpack.c.h.b16 %v134
    %v232 = vunpack.c.l.b16 %v135
    %v233 = vunpack.c.h.b16 %v135
    %v234 = vunpack.c.l.b16 %v136
    %v235 = vunpack.c.h.b16 %v136
    %v236 = vunpack.c.l.b16 %v137
    %v237 = vunpack.c.h.b16 %v137
    %v238 = vunpack.c.l.b16 %v138
    %v239 = vunpack.c.h.b16 %v138
    %v240 = vunpack.c.l.b16 %v139
    %v241 = vunpack.c.h.b16 %v139
    %v242 = vunpack.c.l.b16 %v140
    %v243 = vunpack.c.h.b16 %v140
    %v244 = vunpack.c.l.b16 %v141
    %v245 = vunpack.c.h.b16 %v141
    %v246 = vunpack.c.l.b16 %v142
    %v247 = vunpack.c.h.b16 %v142
    %v248 = vunpack.c.l.b16 %v143
    %v249 = vunpack.c.h.b16 %v143
    %v250 = vunpack.c.l.b16 %v144
    %v251 = vunpack.c.h.b16 %v144
    %v252 = vunpack.c.l.b16 %v145
    %v253 = vunpack.c.h.b16 %v145
    %v254 = vunpack.c.l.b16 %v146
    %v255 = vunpack.c.h.b16 %v146
    %v256 = vunpack.c.l.b16 %v147
    %v257 = vunpack.c.h.b16 %v147
    %v258 = vunpack.c.l.b16 %v148
    %v259 = vunpack.c.h.b16 %v148
    %v260 = vunpack.c.l.b16 %v149
    %v261 = vunpack.c.h.b16 %v149
    %v262 = vunpack.c.l.b16 %v150
    %v263 = vunpack.c.h.b16 %v150
    %v264 = vunpack.c.l.b16 %v151
    %v265 = vunpack.c.h.b16 %v151
    %v266 = vunpack.c.l.b16 %v152
    %v267 = vunpack.c.h.b16 %v152
    %v268 = vunpack.c.l.b16 %v153
    %v269 = vunpack.c.h.b16 %v153
    %v270 = vunpack.c.l.b16 %v154
    %v271 = vunpack.c.h.b16 %v154
    %v272 = vunpack.c.l.b16 %v155
    %v273 = vunpack.c.h.b16 %v155
    %v274 = vpack.c.b16 %v214, %v210
    %v275 = vpack.c.b16 %v215, %v211
    %v276 = vpack.c.b16 %v216, %v212
    %v277 = vpack.c.b16 %v217, %v213
    %v278 = vpack.c.b16 %v222, %v218
    %v279 = vpack.c.b16 %v223, %v219
    %v280 = vpack.c.b16 %v224, %v220
    %v281 = vpack.c.b16 %v225, %v221
    %v282 = vpack.c.b16 %v230, %v226
    %v283 = vpack.c.b16 %v231, %v227
    %v284 = vpack.c.b16 %v232, %v228
    %v285 = vpack.c.b16 %v233, %v229
    %v286 = vpack.c.b16 %v238, %v234
    %v287 = vpack.c.b16 %v239, %v235
    %v288 = vpack.c.b16 %v240, %v236
    %v289 = vpack.c.b16 %v241, %v237
    %v290 = vpack.c.b16 %v246, %v242
    %v291 = vpack.c.b16 %v247, %v243
    %v292 = vpack.c.b16 %v248, %v244
    %v293 = vpack.c.b16 %v249, %v245
    %v294 = vpack.c.b16 %v254, %v250
    %v295 = vpack.c.b16 %v255, %v251
    %v296 = vpack.c.b16 %v256, %v252
    %v297 = vpack.c.b16 %v257, %v253
    %v298 = vpack.c.b16 %v262, %v258
    %v299 = vpack.c.b16 %v263, %v259
    %v300 = vpack.c.b16 %v264, %v260
    %v301 = vpack.c.b16 %v265, %v261
    %v302 = vpack.c.b16 %v270, %v266
    %v303 = vpack.c.b16 %v271, %v267
    %v304 = vpack.c.b16 %v272, %v268
    %v305 = vpack.c.b16 %v273, %v269
    %338 = vmatprep.subr.bf16.mxu0 %v275
    %339 = vmatpush1.bf16.msra.mxu0 %v274
    %340 = vmatprep.subr.bf16.mxu0 %v279
    %341 = vmatpush1.bf16.msra.mxu0 %v278
    %342 = vmatprep.subr.bf16.mxu0 %v283
    %343 = vmatpush1.bf16.msra.mxu0 %v282
    %344 = vmatprep.subr.bf16.mxu0 %v287
    %345 = vmatpush1.bf16.msra.mxu0 %v286
    %346 = vmatprep.subr.bf16.mxu0 %v291
    %347 = vmatpush1.bf16.msra.mxu0 %v290
    %348 = vmatprep.subr.bf16.mxu0 %v295
    %349 = vmatpush1.bf16.msra.mxu0 %v294
    %350 = vmatprep.subr.bf16.mxu0 %v299
    %351 = vmatpush1.bf16.msra.mxu0 %v298
    %352 = vmatprep.subr.bf16.mxu0 %v303
    %353 = vmatpush1.bf16.msra.mxu0 %v302
    %354 = vmatprep.subr.bf16.mxu0 0
    %355 = vmatpush1.bf16.msra.mxu0 0
    %356 = vmatprep.subr.bf16.mxu0 0
    %357 = vmatpush1.bf16.msra.mxu0 0
    %358 = vmatprep.subr.bf16.mxu0 0
    %359 = vmatpush1.bf16.msra.mxu0 0
    %360 = vmatprep.subr.bf16.mxu0 0
    %361 = vmatpush1.bf16.msra.mxu0 0
    %362 = vmatprep.subr.bf16.mxu0 0
    %363 = vmatpush1.bf16.msra.mxu0 0
    %364 = vmatprep.subr.bf16.mxu0 0
    %365 = vmatpush1.bf16.msra.mxu0 0
    %366 = vmatprep.subr.bf16.mxu0 0
    %367 = vmatpush1.bf16.msra.mxu0 0
    %368 = vmatprep.subr.bf16.mxu0 0
    %369 = vmatpush1.bf16.msra.mxu0 0
    %370 = vmatprep.mubr.bf16.mxu0 0
    %371 = vmatmul.mubr.bf16.gmra.mrb[0].mxu0 %v123
    %v372 = vpop.f32.mrb[0].mxu0
    %v373 = vadd.f32 %v161, %v372
    %v374 = vpop.f32.mrb[0].mxu0
    %v375 = vadd.f32 %v165, %v374
    %v376 = vpop.f32.mrb[0].mxu0
    %v377 = vadd.f32 %v161, %v376
    %v378 = vpop.f32.mrb[0].mxu0
    %v379 = vadd.f32 %v165, %v378
    %380 = vdwg.mxu0
    %381 = vmatprep.subr.bf16.mxu0 %v277
    %382 = vmatpush1.bf16.msra.mxu0 %v276
    %383 = vmatprep.subr.bf16.mxu0 %v281
    %384 = vmatpush1.bf16.msra.mxu0 %v280
    %385 = vmatprep.subr.bf16.mxu0 %v285
    %386 = vmatpush1.bf16.msra.mxu0 %v284
    %387 = vmatprep.subr.bf16.mxu0 %v289
    %388 = vmatpush1.bf16.msra.mxu0 %v288
    %389 = vmatprep.subr.bf16.mxu0 %v293
    %390 = vmatpush1.bf16.msra.mxu0 %v292
    %391 = vmatprep.subr.bf16.mxu0 %v297
    %392 = vmatpush1.bf16.msra.mxu0 %v296
    %393 = vmatprep.subr.bf16.mxu0 %v301
    %394 = vmatpush1.bf16.msra.mxu0 %v300
    %395 = vmatprep.subr.bf16.mxu0 %v305
    %396 = vmatpush1.bf16.msra.mxu0 %v304
    %397 = vmatprep.subr.bf16.mxu0 0
    %398 = vmatpush1.bf16.msra.mxu0 0
    %399 = vmatprep.subr.bf16.mxu0 0
    %400 = vmatpush1.bf16.msra.mxu0 0
    %401 = vmatprep.subr.bf16.mxu0 0
    %402 = vmatpush1.bf16.msra.mxu0 0
    %403 = vmatprep.subr.bf16.mxu0 0
    %404 = vmatpush1.bf16.msra.mxu0 0
    %405 = vmatprep.subr.bf16.mxu0 0
    %406 = vmatpush1.bf16.msra.mxu0 0
    %407 = vmatprep.subr.bf16.mxu0 0
    %408 = vmatpush1.bf16.msra.mxu0 0
    %409 = vmatprep.subr.bf16.mxu0 0
    %410 = vmatpush1.bf16.msra.mxu0 0
    %411 = vmatprep.subr.bf16.mxu0 0
    %412 = vmatpush1.bf16.msra.mxu0 0
    %413 = vmatprep.mubr.bf16.mxu0 0
    %414 = vmatmul.mubr.bf16.gmra.mrb[0].mxu0 %v123
    %v415 = vpop.f32.mrb[0].mxu0
    %v416 = vadd.f32 %v169, %v415
    %v417 = vpop.f32.mrb[0].mxu0
    %v418 = vadd.f32 %v173, %v417
    %v419 = vpop.f32.mrb[0].mxu0
    %v420 = vadd.f32 %v169, %v419
    %v421 = vpop.f32.mrb[0].mxu0
    %v422 = vadd.f32 %v173, %v421
    %423 = vdwg.mxu0
    %v424 = vmul.f32 %v373, 0.5
    %v425 = vmul.f32 %v375, 0.5
    %v426 = vmul.f32 %v416, 0.5
    %v427 = vmul.f32 %v418, 0.5
    %v428 = vmul.f32 %v377, 0.5
    %v429 = vmul.f32 %v379, 0.5
    %v430 = vmul.f32 %v420, 0.5
    %v431 = vmul.f32 %v422, 0.5
    %v432 = vmul.f32 %v373, 0.044715
    %v433 = vmul.f32 %v375, 0.044715
    %v434 = vmul.f32 %v416, 0.044715
    %v435 = vmul.f32 %v418, 0.044715
    %v436 = vmul.f32 %v377, 0.044715
    %v437 = vmul.f32 %v379, 0.044715
    %v438 = vmul.f32 %v420, 0.044715
    %v439 = vmul.f32 %v422, 0.044715
    %v440 = vmul.f32 %v432, %v373
    %v441 = vmul.f32 %v433, %v375
    %v442 = vmul.f32 %v434, %v416
    %v443 = vmul.f32 %v435, %v418
    %v444 = vmul.f32 %v436, %v377
    %v445 = vmul.f32 %v437, %v379
    %v446 = vmul.f32 %v438, %v420
    %v447 = vmul.f32 %v439, %v422
    %v448 = vmul.f32 %v440, %v373
    %v449 = vmul.f32 %v441, %v375
    %v450 = vmul.f32 %v442, %v416
    %v451 = vmul.f32 %v443, %v418
    %v452 = vmul.f32 %v444, %v377
    %v453 = vmul.f32 %v445, %v379
    %v454 = vmul.f32 %v446, %v420
    %v455 = vmul.f32 %v447, %v422
    %v456 = vadd.f32 %v373, %v448
    %v457 = vadd.f32 %v375, %v449
    %v458 = vadd.f32 %v416, %v450
    %v459 = vadd.f32 %v418, %v451
    %v460 = vadd.f32 %v377, %v452
    %v461 = vadd.f32 %v379, %v453
    %v462 = vadd.f32 %v420, %v454
    %v463 = vadd.f32 %v422, %v455
    %v464 = vmul.f32 %v456, 0.7978846
    %v465 = vmul.f32 %v457, 0.7978846
    %v466 = vmul.f32 %v458, 0.7978846
    %v467 = vmul.f32 %v459, 0.7978846
    %v468 = vmul.f32 %v460, 0.7978846
    %v469 = vmul.f32 %v461, 0.7978846
    %v470 = vmul.f32 %v462, 0.7978846
    %v471 = vmul.f32 %v463, 0.7978846
    %v472 = vtanh.pop %v464
    %v473 = vtanh.pop %v465
    %v474 = vtanh.pop %v466
    %v475 = vtanh.pop %v467
    %v476 = vtanh.pop %v468
    %v477 = vtanh.pop %v469
    %v478 = vtanh.pop %v470
    %v479 = vtanh.pop %v471
    %v480 = vadd.f32 %v472, 1.0
    %v481 = vadd.f32 %v473, 1.0
    %v482 = vadd.f32 %v474, 1.0
    %v483 = vadd.f32 %v475, 1.0
    %v484 = vadd.f32 %v476, 1.0
    %v485 = vadd.f32 %v477, 1.0
    %v486 = vadd.f32 %v478, 1.0
    %v487 = vadd.f32 %v479, 1.0
    %v488 = vmul.f32 %v424, %v480
    %v489 = vmul.f32 %v425, %v481
    %v490 = vmul.f32 %v426, %v482
    %v491 = vmul.f32 %v427, %v483
    %v492 = vmul.f32 %v428, %v484
    %v493 = vmul.f32 %v429, %v485
    %v494 = vmul.f32 %v430, %v486
    %v495 = vmul.f32 %v431, %v487
    %v496 = vld [vmem:[#allocation2] sm:$0xff]
    %v497 = vld [vmem:[#allocation2 + $0x8] sm:$0xff]
    %v498 = vpack.c.bf16 %v492, %v488
    %v499 = vpack.c.bf16 %v493, %v489
    %v500 = vpack.c.bf16 %v494, %v490
    %v501 = vpack.c.bf16 %v495, %v491
    %v502 = vld [vmem:[#allocation9] sm:$0xf]
    %v503 = vld [vmem:[#allocation9 + $0x4] sm:$0xf]
    %v504 = vld [vmem:[#allocation9 + $0x8] sm:$0xf]
    %v505 = vld [vmem:[#allocation9 + $0xc] sm:$0xf]
    %v506 = vld [vmem:[#allocation9 + $0x10] sm:$0xf]
    %v507 = vld [vmem:[#allocation9 + $0x14] sm:$0xf]
    %v508 = vld [vmem:[#allocation9 + $0x18] sm:$0xf]
    %v509 = vld [vmem:[#allocation9 + $0x1c] sm:$0xf]
    %v510 = vld [vmem:[#allocation9 + $0x20] sm:$0xf]
    %v511 = vld [vmem:[#allocation9 + $0x24] sm:$0xf]
    %v512 = vld [vmem:[#allocation9 + $0x28] sm:$0xf]
    %v513 = vld [vmem:[#allocation9 + $0x2c] sm:$0xf]
    %v514 = vld [vmem:[#allocation9 + $0x30] sm:$0xf]
    %v515 = vld [vmem:[#allocation9 + $0x34] sm:$0xf]
    %v516 = vld [vmem:[#allocation9 + $0x38] sm:$0xf]
    %v517 = vld [vmem:[#allocation9 + $0x3c] sm:$0xf]
    %v518 = vld [vmem:[#allocation9 + $0x40] sm:$0xf]
    %v519 = vld [vmem:[#allocation9 + $0x44] sm:$0xf]
    %v520 = vld [vmem:[#allocation9 + $0x48] sm:$0xf]
    %v521 = vld [vmem:[#allocation9 + $0x4c] sm:$0xf]
    %v522 = vld [vmem:[#allocation9 + $0x50] sm:$0xf]
    %v523 = vld [vmem:[#allocation9 + $0x54] sm:$0xf]
    %v524 = vld [vmem:[#allocation9 + $0x58] sm:$0xf]
    %v525 = vld [vmem:[#allocation9 + $0x5c] sm:$0xf]
    %v526 = vld [vmem:[#allocation9 + $0x60] sm:$0xf]
    %v527 = vld [vmem:[#allocation9 + $0x64] sm:$0xf]
    %v528 = vld [vmem:[#allocation9 + $0x68] sm:$0xf]
    %v529 = vld [vmem:[#allocation9 + $0x6c] sm:$0xf]
    %v530 = vld [vmem:[#allocation9 + $0x70] sm:$0xf]
    %v531 = vld [vmem:[#allocation9 + $0x74] sm:$0xf]
    %v532 = vld [vmem:[#allocation9 + $0x78] sm:$0xf]
    %v533 = vld [vmem:[#allocation9 + $0x7c] sm:$0xf]
    %v534 = vld [vmem:[#allocation9 + $0x80] sm:$0xf]
    %v535 = vld [vmem:[#allocation9 + $0x84] sm:$0xf]
    %v536 = vld [vmem:[#allocation9 + $0x88] sm:$0xf]
    %v537 = vld [vmem:[#allocation9 + $0x8c] sm:$0xf]
    %v538 = vld [vmem:[#allocation9 + $0x90] sm:$0xf]
    %v539 = vld [vmem:[#allocation9 + $0x94] sm:$0xf]
    %v540 = vld [vmem:[#allocation9 + $0x98] sm:$0xf]
    %v541 = vld [vmem:[#allocation9 + $0x9c] sm:$0xf]
    %v542 = vld [vmem:[#allocation9 + $0xa0] sm:$0xf]
    %v543 = vld [vmem:[#allocation9 + $0xa4] sm:$0xf]
    %v544 = vld [vmem:[#allocation9 + $0xa8] sm:$0xf]
    %v545 = vld [vmem:[#allocation9 + $0xac] sm:$0xf]
    %v546 = vld [vmem:[#allocation9 + $0xb0] sm:$0xf]
    %v547 = vld [vmem:[#allocation9 + $0xb4] sm:$0xf]
    %v548 = vld [vmem:[#allocation9 + $0xb8] sm:$0xf]
    %v549 = vld [vmem:[#allocation9 + $0xbc] sm:$0xf]
    %v550 = vld [vmem:[#allocation9 + $0xc0] sm:$0xf]
    %v551 = vld [vmem:[#allocation9 + $0xc4] sm:$0xf]
    %v552 = vld [vmem:[#allocation9 + $0xc8] sm:$0xf]
    %v553 = vld [vmem:[#allocation9 + $0xcc] sm:$0xf]
    %v554 = vld [vmem:[#allocation9 + $0xd0] sm:$0xf]
    %v555 = vld [vmem:[#allocation9 + $0xd4] sm:$0xf]
    %v556 = vld [vmem:[#allocation9 + $0xd8] sm:$0xf]
    %v557 = vld [vmem:[#allocation9 + $0xdc] sm:$0xf]
    %v558 = vld [vmem:[#allocation9 + $0xe0] sm:$0xf]
    %v559 = vld [vmem:[#allocation9 + $0xe4] sm:$0xf]
    %v560 = vld [vmem:[#allocation9 + $0xe8] sm:$0xf]
    %v561 = vld [vmem:[#allocation9 + $0xec] sm:$0xf]
    %v562 = vld [vmem:[#allocation9 + $0xf0] sm:$0xf]
    %v563 = vld [vmem:[#allocation9 + $0xf4] sm:$0xf]
    %v564 = vld [vmem:[#allocation9 + $0xf8] sm:$0xf]
    %v565 = vld [vmem:[#allocation9 + $0xfc] sm:$0xf]
    %v630 = vunpack.c.l.b16 %v502
    %v631 = vunpack.c.l.b16 %v503
    %v632 = vunpack.c.l.b16 %v504
    %v633 = vunpack.c.l.b16 %v505
    %v634 = vunpack.c.l.b16 %v506
    %v635 = vunpack.c.l.b16 %v507
    %v636 = vunpack.c.l.b16 %v508
    %v637 = vunpack.c.l.b16 %v509
    %v638 = vunpack.c.l.b16 %v510
    %v639 = vunpack.c.l.b16 %v511
    %v640 = vunpack.c.l.b16 %v512
    %v641 = vunpack.c.l.b16 %v513
    %v642 = vunpack.c.l.b16 %v514
    %v643 = vunpack.c.l.b16 %v515
    %v644 = vunpack.c.l.b16 %v516
    %v645 = vunpack.c.l.b16 %v517
    %v646 = vunpack.c.l.b16 %v518
    %v647 = vunpack.c.l.b16 %v519
    %v648 = vunpack.c.l.b16 %v520
    %v649 = vunpack.c.l.b16 %v521
    %v650 = vunpack.c.l.b16 %v522
    %v651 = vunpack.c.l.b16 %v523
    %v652 = vunpack.c.l.b16 %v524
    %v653 = vunpack.c.l.b16 %v525
    %v654 = vunpack.c.l.b16 %v526
    %v655 = vunpack.c.l.b16 %v527
    %v656 = vunpack.c.l.b16 %v528
    %v657 = vunpack.c.l.b16 %v529
    %v658 = vunpack.c.l.b16 %v530
    %v659 = vunpack.c.l.b16 %v531
    %v660 = vunpack.c.l.b16 %v532
    %v661 = vunpack.c.l.b16 %v533
    %v662 = vunpack.c.l.b16 %v534
    %v663 = vunpack.c.l.b16 %v535
    %v664 = vunpack.c.l.b16 %v536
    %v665 = vunpack.c.l.b16 %v537
    %v666 = vunpack.c.l.b16 %v538
    %v667 = vunpack.c.l.b16 %v539
    %v668 = vunpack.c.l.b16 %v540
    %v669 = vunpack.c.l.b16 %v541
    %v670 = vunpack.c.l.b16 %v542
    %v671 = vunpack.c.l.b16 %v543
    %v672 = vunpack.c.l.b16 %v544
    %v673 = vunpack.c.l.b16 %v545
    %v674 = vunpack.c.l.b16 %v546
    %v675 = vunpack.c.l.b16 %v547
    %v676 = vunpack.c.l.b16 %v548
    %v677 = vunpack.c.l.b16 %v549
    %v678 = vunpack.c.l.b16 %v550
    %v679 = vunpack.c.l.b16 %v551
    %v680 = vunpack.c.l.b16 %v552
    %v681 = vunpack.c.l.b16 %v553
    %v682 = vunpack.c.l.b16 %v554
    %v683 = vunpack.c.l.b16 %v555
    %v684 = vunpack.c.l.b16 %v556
    %v685 = vunpack.c.l.b16 %v557
    %v686 = vunpack.c.l.b16 %v558
    %v687 = vunpack.c.l.b16 %v559
    %v688 = vunpack.c.l.b16 %v560
    %v689 = vunpack.c.l.b16 %v561
    %v690 = vunpack.c.l.b16 %v562
    %v691 = vunpack.c.l.b16 %v563
    %v692 = vunpack.c.l.b16 %v564
    %v693 = vunpack.c.l.b16 %v565
    %v694 = vpack.c.b16 %v631, %v630
    %v695 = vpack.c.b16 %v633, %v632
    %v696 = vpack.c.b16 %v635, %v634
    %v697 = vpack.c.b16 %v637, %v636
    %v698 = vpack.c.b16 %v639, %v638
    %v699 = vpack.c.b16 %v641, %v640
    %v700 = vpack.c.b16 %v643, %v642
    %v701 = vpack.c.b16 %v645, %v644
    %v702 = vpack.c.b16 %v647, %v646
    %v703 = vpack.c.b16 %v649, %v648
    %v704 = vpack.c.b16 %v651, %v650
    %v705 = vpack.c.b16 %v653, %v652
    %v706 = vpack.c.b16 %v655, %v654
    %v707 = vpack.c.b16 %v657, %v656
    %v708 = vpack.c.b16 %v659, %v658
    %v709 = vpack.c.b16 %v661, %v660
    %v710 = vpack.c.b16 %v663, %v662
    %v711 = vpack.c.b16 %v665, %v664
    %v712 = vpack.c.b16 %v667, %v666
    %v713 = vpack.c.b16 %v669, %v668
    %v714 = vpack.c.b16 %v671, %v670
    %v715 = vpack.c.b16 %v673, %v672
    %v716 = vpack.c.b16 %v675, %v674
    %v717 = vpack.c.b16 %v677, %v676
    %v718 = vpack.c.b16 %v679, %v678
    %v719 = vpack.c.b16 %v681, %v680
    %v720 = vpack.c.b16 %v683, %v682
    %v721 = vpack.c.b16 %v685, %v684
    %v722 = vpack.c.b16 %v687, %v686
    %v723 = vpack.c.b16 %v689, %v688
    %v724 = vpack.c.b16 %v691, %v690
    %v725 = vpack.c.b16 %v693, %v692
    %758 = vmatprep.subr.bf16.mxu0 0
    %759 = vmatpush1.bf16.msra.mxu0 %v694
    %760 = vmatprep.subr.bf16.mxu0 0
    %761 = vmatpush1.bf16.msra.mxu0 %v695
    %762 = vmatprep.subr.bf16.mxu0 0
    %763 = vmatpush1.bf16.msra.mxu0 %v696
    %764 = vmatprep.subr.bf16.mxu0 0
    %765 = vmatpush1.bf16.msra.mxu0 %v697
    %766 = vmatprep.subr.bf16.mxu0 0
    %767 = vmatpush1.bf16.msra.mxu0 %v698
    %768 = vmatprep.subr.bf16.mxu0 0
    %769 = vmatpush1.bf16.msra.mxu0 %v699
    %770 = vmatprep.subr.bf16.mxu0 0
    %771 = vmatpush1.bf16.msra.mxu0 %v700
    %772 = vmatprep.subr.bf16.mxu0 0
    %773 = vmatpush1.bf16.msra.mxu0 %v701
    %774 = vmatprep.subr.bf16.mxu0 0
    %775 = vmatpush1.bf16.msra.mxu0 %v702
    %776 = vmatprep.subr.bf16.mxu0 0
    %777 = vmatpush1.bf16.msra.mxu0 %v703
    %778 = vmatprep.subr.bf16.mxu0 0
    %779 = vmatpush1.bf16.msra.mxu0 %v704
    %780 = vmatprep.subr.bf16.mxu0 0
    %781 = vmatpush1.bf16.msra.mxu0 %v705
    %782 = vmatprep.subr.bf16.mxu0 0
    %783 = vmatpush1.bf16.msra.mxu0 %v706
    %784 = vmatprep.subr.bf16.mxu0 0
    %785 = vmatpush1.bf16.msra.mxu0 %v707
    %786 = vmatprep.subr.bf16.mxu0 0
    %787 = vmatpush1.bf16.msra.mxu0 %v708
    %788 = vmatprep.subr.bf16.mxu0 0
    %789 = vmatpush1.bf16.msra.mxu0 %v709
    %790 = vmatprep.mubr.bf16.mxu0 %v499
    %791 = vmatmul.mubr.bf16.gmra.mrb[0].mxu0 %v498
    %v792 = vpop.f32.mrb[0].mxu0
    %v793 = vadd.f32 0.0, %v792
    %v794 = vpop.f32.mrb[0].mxu0
    %v795 = vpop.f32.mrb[0].mxu0
    %v796 = vadd.f32 0.0, %v795
    %v797 = vpop.f32.mrb[0].mxu0
    %798 = vdwg.mxu0
    %799 = vmatprep.subr.bf16.mxu0 0
    %800 = vmatpush1.bf16.msra.mxu0 %v710
    %801 = vmatprep.subr.bf16.mxu0 0
    %802 = vmatpush1.bf16.msra.mxu0 %v711
    %803 = vmatprep.subr.bf16.mxu0 0
    %804 = vmatpush1.bf16.msra.mxu0 %v712
    %805 = vmatprep.subr.bf16.mxu0 0
    %806 = vmatpush1.bf16.msra.mxu0 %v713
    %807 = vmatprep.subr.bf16.mxu0 0
    %808 = vmatpush1.bf16.msra.mxu0 %v714
    %809 = vmatprep.subr.bf16.mxu0 0
    %810 = vmatpush1.bf16.msra.mxu0 %v715
    %811 = vmatprep.subr.bf16.mxu0 0
    %812 = vmatpush1.bf16.msra.mxu0 %v716
    %813 = vmatprep.subr.bf16.mxu0 0
    %814 = vmatpush1.bf16.msra.mxu0 %v717
    %815 = vmatprep.subr.bf16.mxu0 0
    %816 = vmatpush1.bf16.msra.mxu0 %v718
    %817 = vmatprep.subr.bf16.mxu0 0
    %818 = vmatpush1.bf16.msra.mxu0 %v719
    %819 = vmatprep.subr.bf16.mxu0 0
    %820 = vmatpush1.bf16.msra.mxu0 %v720
    %821 = vmatprep.subr.bf16.mxu0 0
    %822 = vmatpush1.bf16.msra.mxu0 %v721
    %823 = vmatprep.subr.bf16.mxu0 0
    %824 = vmatpush1.bf16.msra.mxu0 %v722
    %825 = vmatprep.subr.bf16.mxu0 0
    %826 = vmatpush1.bf16.msra.mxu0 %v723
    %827 = vmatprep.subr.bf16.mxu0 0
    %828 = vmatpush1.bf16.msra.mxu0 %v724
    %829 = vmatprep.subr.bf16.mxu0 0
    %830 = vmatpush1.bf16.msra.mxu0 %v725
    %831 = vmatprep.mubr.bf16.mxu0 %v501
    %832 = vmatmul.mubr.bf16.gmra.mrb[0].mxu0 %v500
    %v833 = vpop.f32.mrb[0].mxu0
    %v834 = vadd.f32 %v793, %v833
    %v835 = vpop.f32.mrb[0].mxu0
    %v836 = vpop.f32.mrb[0].mxu0
    %v837 = vadd.f32 %v796, %v836
    %v838 = vpop.f32.mrb[0].mxu0
    %839 = vdwg.mxu0
    %v840 = vadd.f32 %v496, %v834
    %v841 = vadd.f32 %v497, %v837
    %842 = vst [vmem:[#allocation2] sm:$0xff] %v840
    %843 = vst [vmem:[#allocation2 + $0x8] sm:$0xff] %v841
    // Predicated region
    $region62: #{tpu_custom_call.1} parent=1 // pred_check
      %p844 = pneg %p115
    $region63: #{tpu_custom_call.1} parent=1 // pred_check_branch
      %846 = sbr.rel (%p844) target = $region65
    $region64: #{tpu_custom_call.1} parent=1 // pred_region
      %v847 = vld [vmem:[#allocation2] sm:$0xff]
      %v848 = vld [vmem:[#allocation2 + $0x8] sm:$0xff]
      %v849 = vld [vmem:[#allocation11] sm:$0x1]
      %v851 = vlaneseq
      %v852 = vshrl.u32 %v851, 7
      %v853 = vsub.s32 0, %v852
      %v854 = vrot.slane %v849, %v853
      %v856 = vadd.f32 %v847, %v854
      %v857 = vadd.f32 %v848, %v854
      %v858 = vld [vmem:[#allocation3] sm:$0xff]
      %v859 = vld [vmem:[#allocation3 + $0x8] sm:$0xff]
      %v860 = vadd.f32 %v856, %v858
      %v861 = vadd.f32 %v857, %v859
      %862 = vadd.xlane.f32.xlu0 %v860
      %v863 = vpop.xlane.xlu0 %862
      %864 = vadd.xlane.f32.xlu0 %v861
      %v865 = vpop.xlane.xlu0 %864
      %v866 = vmul.f32 %v860, %v860
      %v867 = vmul.f32 %v861, %v861
      %868 = vadd.xlane.f32.xlu0 %v866
      %v869 = vpop.xlane.xlu0 %868
      %870 = vadd.xlane.f32.xlu0 %v867
      %v871 = vpop.xlane.xlu0 %870
      %v872 = vmul.f32 %v863, 0.0078125
      %v873 = vmul.f32 %v865, 0.0078125
      %v874 = vmul.f32 %v869, 0.0078125
      %v875 = vmul.f32 %v871, 0.0078125
      %v876 = vmul.f32 %v872, %v872
      %v877 = vmul.f32 %v873, %v873
      %v878 = vsub.f32 %v874, %v876
      %v879 = vsub.f32 %v875, %v877
      %v880 = vmax.f32 %v878, 0.0
      %v881 = vmax.f32 %v879, 0.0
      %v882 = vsub.f32 %v860, %v872
      %v883 = vsub.f32 %v861, %v873
      %v884 = vadd.f32 %v880, 1e-12
      %v885 = vadd.f32 %v881, 1e-12
      %v886 = vrsqrt.pop %v884
      %v887 = vrsqrt.pop %v885
      %v888 = vmul.f32 %v882, %v886
      %v889 = vmul.f32 %v883, %v887
      %v890 = vld [vmem:[#allocation12] sm:$0x1]
      %v892 = vlaneseq
      %v893 = vshrl.u32 %v892, 7
      %v894 = vsub.s32 0, %v893
      %v895 = vrot.slane %v890, %v894
      %v897 = vmul.f32 %v888, %v895
      %v898 = vmul.f32 %v889, %v895
      %v899 = vld [vmem:[#allocation14] sm:$0x1]
      %v901 = vlaneseq
      %v902 = vshrl.u32 %v901, 7
      %v903 = vsub.s32 0, %v902
      %v904 = vrot.slane %v899, %v903
      %v906 = vadd.f32 %v897, %v904
      %v907 = vadd.f32 %v898, %v904
      %908 = vst [vmem:[#allocation15] sm:$0xff] %v906
      %909 = vst [vmem:[#allocation15 + $0x8] sm:$0xff] %v907
    $region65: #{tpu_custom_call.1} parent=1 // pred_fallthru
      _
    // Predicated region
    $region66: #{tpu_custom_call.1} parent=1 // pred_check
      _
    $region67: #{tpu_custom_call.1} parent=1 // pred_check_branch
      %911 = sbr.rel (0) target = $region69
    $region68: #{tpu_custom_call.1} parent=1 // pred_region
      %s913 = ssub.s32 256, 256
      %914 = vsyncadd [#allocation5], %s913
      %s915 = sshll.u32 [#allocation15], 4
      %s916 = int_to_ptr.vmem [resolvable:$true] %s915
      %921 = dma.vmem_to_hbm [thread:$0]  %s916, 256, %s7, [#allocation5], 128, 128, 8
    $region69: #{tpu_custom_call.1} parent=1 // pred_fallthru
      _
    // Predicated region
    $region70: #{tpu_custom_call.1} parent=1 // pred_check
      _
    $region71: #{tpu_custom_call.1} parent=1 // pred_check_branch
      %923 = sbr.rel (0) target = $region73
    $region72: #{tpu_custom_call.1} parent=1 // pred_region
      %924 = dma.done [#allocation5], 256
    $region73: #{tpu_custom_call.1} parent=1 // pred_fallthru
      _
    %925 = vsyncpa [#allocation4], 1
    %926 = vsyncpa [#allocation7], 1
    %927 = vsyncpa [#allocation10], 1
    %928 = vsyncpa [#allocation13], 1
    %929 = vsyncpa [#allocation5], 1

</llo_original>
